<compile_context>
chip_gen: v6e
topology: v6e:2x2x1
jax: 0.10.0
libtpu: 0.0.40
codegen_flags: <defaults>
</compile_context>

<pallas_src>
import jax
import jax.numpy as jnp
from jax import lax
from jax.experimental import pallas as pl
from jax.experimental.pallas import tpu as pltpu

LANES = 128   # lane width of a vreg
SUB = 8       # sublane count of a vreg


def _stability_net_kernel(x_ref, w1_ref, b1_ref, w2_ref, b2_ref, w3_ref, b3_ref, o_ref):
    """x_ref: (3, TR, 128) f32 in VMEM  (feature-major; batch on sublanes x lanes).
    w*/b*_ref: flattened f32 params in SMEM (PyTorch [out, in] order, row-major).
    o_ref: (TR, 128) f32 in VMEM (lane-dense output slab)."""
    n_chunks = x_ref.shape[1] // SUB

    def chunk(c, carry):
        r = pl.multiple_of(c * SUB, SUB)
        # One fully dense (8,128) vreg slab per input feature.
        xs = [x_ref[k, pl.ds(r, SUB), :] for k in range(3)]

        # fc1 + ReLU : 16 outputs, scalar-weight splat-FMA on the VPU.
        h1 = []
        for o in range(16):
            acc = w1_ref[o * 3 + 0] * xs[0]
            acc = acc + w1_ref[o * 3 + 1] * xs[1]
            acc = acc + w1_ref[o * 3 + 2] * xs[2]
            h1.append(jnp.maximum(acc + b1_ref[o], 0.0))

        # fc2 + ReLU : 8 outputs.
        h2 = []
        for o in range(8):
            acc = w2_ref[o * 16 + 0] * h1[0]
            for k in range(1, 16):
                acc = acc + w2_ref[o * 16 + k] * h1[k]
            h2.append(jnp.maximum(acc + b2_ref[o], 0.0))

        # fc3 + sigmoid (exp runs on the otherwise-idle EUP slot).
        z = w3_ref[0] * h2[0]
        for k in range(1, 8):
            z = z + w3_ref[k] * h2[k]
        z = z + b3_ref[0]
        o_ref[pl.ds(r, SUB), :] = 1.0 / (1.0 + jnp.exp(-z))
        return carry

    lax.fori_loop(0, n_chunks, chunk, 0)


def stability_net_forward(x, params, *, block_rows=256):
    """x: [B, 3] float32.  params: PyTorch-layout weights w{1,2,3}:[out,in], b{1,2,3}:[out]."""
    B = x.shape[0]
    rows = -(-B // LANES)                                  # rows of 128 samples
    tr = -(-min(block_rows, -(-rows // SUB) * SUB) // SUB) * SUB
    tr = max(SUB, tr)                                      # batch-tile rows (multiple of 8)
    rows_pad = -(-rows // tr) * tr
    b_pad = rows_pad * LANES

    xf = x.astype(jnp.float32)
    if b_pad != B:
        xf = jnp.pad(xf, ((0, b_pad - B), (0, 0)))
    # Feature-major with batch spread over (sublane, lane): [3, rows_pad, 128].
    x_fm = xf.T.reshape(3, rows_pad, LANES)

    flat = lambda a: a.astype(jnp.float32).reshape(-1)
    w1, b1 = flat(params["w1"]), flat(params["b1"])
    w2, b2 = flat(params["w2"]), flat(params["b2"])
    w3, b3 = flat(params["w3"]), flat(params["b3"])

    smem_specs = [pl.BlockSpec(memory_space=pltpu.MemorySpace.SMEM) for _ in range(6)]

    out = pl.pallas_call(
        _stability_net_kernel,
        out_shape=jax.ShapeDtypeStruct((rows_pad, LANES), jnp.float32),
        grid=(rows_pad // tr,),
        in_specs=[pl.BlockSpec((3, tr, LANES), lambda i: (0, i, 0))] + smem_specs,
        out_specs=pl.BlockSpec((tr, LANES), lambda i: (i, 0)),
        compiler_params=pltpu.CompilerParams(
            dimension_semantics=("parallel",),   # shard batch tiles across TCs on v7x
        ),
    )(x_fm, w1, b1, w2, b2, w3, b3)

    return out.reshape(-1)[:B].reshape(B, 1)


def init_params(key):
    """Deterministic init mimicking PyTorch nn.Linear default (U[-1/sqrt(fan_in), +]),
    stored in PyTorch native layout: W [out, in], b [out]."""
    dims = [(16, 3), (8, 16), (1, 8)]
    params = {}
    for i, (fout, fin) in enumerate(dims, start=1):
        key, kw, kb = jax.random.split(key, 3)
        bound = 1.0 / jnp.sqrt(float(fin))
        params[f"w{i}"] = jax.random.uniform(kw, (fout, fin), jnp.float32, -bound, bound)
        params[f"b{i}"] = jax.random.uniform(kb, (fout,), jnp.float32, -bound, bound)
    return params


if __name__ == "__main__":
    key = jax.random.PRNGKey(0)
    key, kx = jax.random.split(key)

    B = 8  # small batch
    x = jax.random.normal(kx, (B, 3), jnp.float32)
    params = init_params(key)

    out = jax.block_until_ready(stability_net_forward(x, params))

    # Pure-JAX reference (exact f32 matmuls so it matches the VPU kernel bit-closely).
    hp = jax.lax.Precision.HIGHEST
    h1 = jnp.maximum(jnp.dot(x, params["w1"].T, precision=hp) + params["b1"], 0.0)
    h2 = jnp.maximum(jnp.dot(h1, params["w2"].T, precision=hp) + params["b2"], 0.0)
    ref = jax.nn.sigmoid(jnp.dot(h2, params["w3"].T, precision=hp) + params["b3"]).reshape(B, 1)

    assert out.shape == (B, 1)
    assert jnp.allclose(out, ref, atol=1e-5, rtol=1e-5), "mismatch vs reference"

    print("KERNEL_OK")
</pallas_src>

<mosaic_0001>
module attributes {stable_mosaic.version = 11 : i64} {
  func.func @_stability_net_kernel(%arg0: i32, %arg1: memref<3x8x128xf32, #tpu.memory_space<vmem>>, %arg2: memref<48xf32, #tpu.memory_space<smem>>, %arg3: memref<16xf32, #tpu.memory_space<smem>>, %arg4: memref<128xf32, #tpu.memory_space<smem>>, %arg5: memref<8xf32, #tpu.memory_space<smem>>, %arg6: memref<8xf32, #tpu.memory_space<smem>>, %arg7: memref<1xf32, #tpu.memory_space<smem>>, %arg8: memref<8x128xf32, #tpu.memory_space<vmem>>) attributes {dimension_semantics = [#tpu.dimension_semantics<parallel>], iteration_bounds = array<i64: 1>, scalar_prefetch = 0 : i64, scratch_operands = 0 : i64, tpu.core_type = #tpu.core_type<tc>, window_params = [{transform_indices = @transform_0, window_bounds = array<i64: 3, 8, 128>}, {transform_indices = @transform_1, window_bounds = array<i64: 48>}, {transform_indices = @transform_2, window_bounds = array<i64: 16>}, {transform_indices = @transform_3, window_bounds = array<i64: 128>}, {transform_indices = @transform_4, window_bounds = array<i64: 8>}, {transform_indices = @transform_5, window_bounds = array<i64: 8>}, {transform_indices = @transform_6, window_bounds = array<i64: 1>}, {transform_indices = @transform_7, window_bounds = array<i64: 8, 128>}]} {
    %c0_i32 = arith.constant 0 : i32
    %c8_i32 = arith.constant 8 : i32
    %0 = arith.muli %c0_i32, %c8_i32 : i32
    %1 = tpu.assume_multiple %0, 8 : i32
    %c0 = arith.constant 0 : index
    %2 = arith.index_cast %1 : i32 to index
    %c0_0 = arith.constant 0 : index
    %3 = vector.load %arg1[%c0, %2, %c0_0] : memref<3x8x128xf32, #tpu.memory_space<vmem>>, vector<1x8x128xf32>
    %4 = vector.shape_cast %3 : vector<1x8x128xf32> to vector<8x128xf32>
    %c1 = arith.constant 1 : index
    %5 = arith.index_cast %1 : i32 to index
    %c0_1 = arith.constant 0 : index
    %6 = vector.load %arg1[%c1, %5, %c0_1] : memref<3x8x128xf32, #tpu.memory_space<vmem>>, vector<1x8x128xf32>
    %7 = vector.shape_cast %6 : vector<1x8x128xf32> to vector<8x128xf32>
    %c2 = arith.constant 2 : index
    %8 = arith.index_cast %1 : i32 to index
    %c0_2 = arith.constant 0 : index
    %9 = vector.load %arg1[%c2, %8, %c0_2] : memref<3x8x128xf32, #tpu.memory_space<vmem>>, vector<1x8x128xf32>
    %10 = vector.shape_cast %9 : vector<1x8x128xf32> to vector<8x128xf32>
    %c0_3 = arith.constant 0 : index
    %11 = memref.load %arg2[%c0_3] : memref<48xf32, #tpu.memory_space<smem>>
    %12 = vector.broadcast %11 : f32 to vector<8x128xf32>
    %13 = arith.mulf %12, %4 : vector<8x128xf32>
    %c1_4 = arith.constant 1 : index
    %14 = memref.load %arg2[%c1_4] : memref<48xf32, #tpu.memory_space<smem>>
    %15 = vector.broadcast %14 : f32 to vector<8x128xf32>
    %16 = arith.mulf %15, %7 : vector<8x128xf32>
    %17 = arith.addf %13, %16 : vector<8x128xf32>
    %c2_5 = arith.constant 2 : index
    %18 = memref.load %arg2[%c2_5] : memref<48xf32, #tpu.memory_space<smem>>
    %19 = vector.broadcast %18 : f32 to vector<8x128xf32>
    %20 = arith.mulf %19, %10 : vector<8x128xf32>
    %21 = arith.addf %17, %20 : vector<8x128xf32>
    %c0_6 = arith.constant 0 : index
    %22 = memref.load %arg3[%c0_6] : memref<16xf32, #tpu.memory_space<smem>>
    %23 = vector.broadcast %22 : f32 to vector<8x128xf32>
    %24 = arith.addf %21, %23 : vector<8x128xf32>
    %cst = arith.constant 0.000000e+00 : f32
    %25 = vector.broadcast %cst : f32 to vector<8x128xf32>
    %26 = arith.maximumf %24, %25 : vector<8x128xf32>
    %c3 = arith.constant 3 : index
    %27 = memref.load %arg2[%c3] : memref<48xf32, #tpu.memory_space<smem>>
    %28 = vector.broadcast %27 : f32 to vector<8x128xf32>
    %29 = arith.mulf %28, %4 : vector<8x128xf32>
    %c4 = arith.constant 4 : index
    %30 = memref.load %arg2[%c4] : memref<48xf32, #tpu.memory_space<smem>>
    %31 = vector.broadcast %30 : f32 to vector<8x128xf32>
    %32 = arith.mulf %31, %7 : vector<8x128xf32>
    %33 = arith.addf %29, %32 : vector<8x128xf32>
    %c5 = arith.constant 5 : index
    %34 = memref.load %arg2[%c5] : memref<48xf32, #tpu.memory_space<smem>>
    %35 = vector.broadcast %34 : f32 to vector<8x128xf32>
    %36 = arith.mulf %35, %10 : vector<8x128xf32>
    %37 = arith.addf %33, %36 : vector<8x128xf32>
    %c1_7 = arith.constant 1 : index
    %38 = memref.load %arg3[%c1_7] : memref<16xf32, #tpu.memory_space<smem>>
    %39 = vector.broadcast %38 : f32 to vector<8x128xf32>
    %40 = arith.addf %37, %39 : vector<8x128xf32>
    %cst_8 = arith.constant 0.000000e+00 : f32
    %41 = vector.broadcast %cst_8 : f32 to vector<8x128xf32>
    %42 = arith.maximumf %40, %41 : vector<8x128xf32>
    %c6 = arith.constant 6 : index
    %43 = memref.load %arg2[%c6] : memref<48xf32, #tpu.memory_space<smem>>
    %44 = vector.broadcast %43 : f32 to vector<8x128xf32>
    %45 = arith.mulf %44, %4 : vector<8x128xf32>
    %c7 = arith.constant 7 : index
    %46 = memref.load %arg2[%c7] : memref<48xf32, #tpu.memory_space<smem>>
    %47 = vector.broadcast %46 : f32 to vector<8x128xf32>
    %48 = arith.mulf %47, %7 : vector<8x128xf32>
    %49 = arith.addf %45, %48 : vector<8x128xf32>
    %c8 = arith.constant 8 : index
    %50 = memref.load %arg2[%c8] : memref<48xf32, #tpu.memory_space<smem>>
    %51 = vector.broadcast %50 : f32 to vector<8x128xf32>
    %52 = arith.mulf %51, %10 : vector<8x128xf32>
    %53 = arith.addf %49, %52 : vector<8x128xf32>
    %c2_9 = arith.constant 2 : index
    %54 = memref.load %arg3[%c2_9] : memref<16xf32, #tpu.memory_space<smem>>
    %55 = vector.broadcast %54 : f32 to vector<8x128xf32>
    %56 = arith.addf %53, %55 : vector<8x128xf32>
    %cst_10 = arith.constant 0.000000e+00 : f32
    %57 = vector.broadcast %cst_10 : f32 to vector<8x128xf32>
    %58 = arith.maximumf %56, %57 : vector<8x128xf32>
    %c9 = arith.constant 9 : index
    %59 = memref.load %arg2[%c9] : memref<48xf32, #tpu.memory_space<smem>>
    %60 = vector.broadcast %59 : f32 to vector<8x128xf32>
    %61 = arith.mulf %60, %4 : vector<8x128xf32>
    %c10 = arith.constant 10 : index
    %62 = memref.load %arg2[%c10] : memref<48xf32, #tpu.memory_space<smem>>
    %63 = vector.broadcast %62 : f32 to vector<8x128xf32>
    %64 = arith.mulf %63, %7 : vector<8x128xf32>
    %65 = arith.addf %61, %64 : vector<8x128xf32>
    %c11 = arith.constant 11 : index
    %66 = memref.load %arg2[%c11] : memref<48xf32, #tpu.memory_space<smem>>
    %67 = vector.broadcast %66 : f32 to vector<8x128xf32>
    %68 = arith.mulf %67, %10 : vector<8x128xf32>
    %69 = arith.addf %65, %68 : vector<8x128xf32>
    %c3_11 = arith.constant 3 : index
    %70 = memref.load %arg3[%c3_11] : memref<16xf32, #tpu.memory_space<smem>>
    %71 = vector.broadcast %70 : f32 to vector<8x128xf32>
    %72 = arith.addf %69, %71 : vector<8x128xf32>
    %cst_12 = arith.constant 0.000000e+00 : f32
    %73 = vector.broadcast %cst_12 : f32 to vector<8x128xf32>
    %74 = arith.maximumf %72, %73 : vector<8x128xf32>
    %c12 = arith.constant 12 : index
    %75 = memref.load %arg2[%c12] : memref<48xf32, #tpu.memory_space<smem>>
    %76 = vector.broadcast %75 : f32 to vector<8x128xf32>
    %77 = arith.mulf %76, %4 : vector<8x128xf32>
    %c13 = arith.constant 13 : index
    %78 = memref.load %arg2[%c13] : memref<48xf32, #tpu.memory_space<smem>>
    %79 = vector.broadcast %78 : f32 to vector<8x128xf32>
    %80 = arith.mulf %79, %7 : vector<8x128xf32>
    %81 = arith.addf %77, %80 : vector<8x128xf32>
    %c14 = arith.constant 14 : index
    %82 = memref.load %arg2[%c14] : memref<48xf32, #tpu.memory_space<smem>>
    %83 = vector.broadcast %82 : f32 to vector<8x128xf32>
    %84 = arith.mulf %83, %10 : vector<8x128xf32>
    %85 = arith.addf %81, %84 : vector<8x128xf32>
    %c4_13 = arith.constant 4 : index
    %86 = memref.load %arg3[%c4_13] : memref<16xf32, #tpu.memory_space<smem>>
    %87 = vector.broadcast %86 : f32 to vector<8x128xf32>
    %88 = arith.addf %85, %87 : vector<8x128xf32>
    %cst_14 = arith.constant 0.000000e+00 : f32
    %89 = vector.broadcast %cst_14 : f32 to vector<8x128xf32>
    %90 = arith.maximumf %88, %89 : vector<8x128xf32>
    %c15 = arith.constant 15 : index
    %91 = memref.load %arg2[%c15] : memref<48xf32, #tpu.memory_space<smem>>
    %92 = vector.broadcast %91 : f32 to vector<8x128xf32>
    %93 = arith.mulf %92, %4 : vector<8x128xf32>
    %c16 = arith.constant 16 : index
    %94 = memref.load %arg2[%c16] : memref<48xf32, #tpu.memory_space<smem>>
    %95 = vector.broadcast %94 : f32 to vector<8x128xf32>
    %96 = arith.mulf %95, %7 : vector<8x128xf32>
    %97 = arith.addf %93, %96 : vector<8x128xf32>
    %c17 = arith.constant 17 : index
    %98 = memref.load %arg2[%c17] : memref<48xf32, #tpu.memory_space<smem>>
    %99 = vector.broadcast %98 : f32 to vector<8x128xf32>
    %100 = arith.mulf %99, %10 : vector<8x128xf32>
    %101 = arith.addf %97, %100 : vector<8x128xf32>
    %c5_15 = arith.constant 5 : index
    %102 = memref.load %arg3[%c5_15] : memref<16xf32, #tpu.memory_space<smem>>
    %103 = vector.broadcast %102 : f32 to vector<8x128xf32>
    %104 = arith.addf %101, %103 : vector<8x128xf32>
    %cst_16 = arith.constant 0.000000e+00 : f32
    %105 = vector.broadcast %cst_16 : f32 to vector<8x128xf32>
    %106 = arith.maximumf %104, %105 : vector<8x128xf32>
    %c18 = arith.constant 18 : index
    %107 = memref.load %arg2[%c18] : memref<48xf32, #tpu.memory_space<smem>>
    %108 = vector.broadcast %107 : f32 to vector<8x128xf32>
    %109 = arith.mulf %108, %4 : vector<8x128xf32>
    %c19 = arith.constant 19 : index
    %110 = memref.load %arg2[%c19] : memref<48xf32, #tpu.memory_space<smem>>
    %111 = vector.broadcast %110 : f32 to vector<8x128xf32>
    %112 = arith.mulf %111, %7 : vector<8x128xf32>
    %113 = arith.addf %109, %112 : vector<8x128xf32>
    %c20 = arith.constant 20 : index
    %114 = memref.load %arg2[%c20] : memref<48xf32, #tpu.memory_space<smem>>
    %115 = vector.broadcast %114 : f32 to vector<8x128xf32>
    %116 = arith.mulf %115, %10 : vector<8x128xf32>
    %117 = arith.addf %113, %116 : vector<8x128xf32>
    %c6_17 = arith.constant 6 : index
    %118 = memref.load %arg3[%c6_17] : memref<16xf32, #tpu.memory_space<smem>>
    %119 = vector.broadcast %118 : f32 to vector<8x128xf32>
    %120 = arith.addf %117, %119 : vector<8x128xf32>
    %cst_18 = arith.constant 0.000000e+00 : f32
    %121 = vector.broadcast %cst_18 : f32 to vector<8x128xf32>
    %122 = arith.maximumf %120, %121 : vector<8x128xf32>
    %c21 = arith.constant 21 : index
    %123 = memref.load %arg2[%c21] : memref<48xf32, #tpu.memory_space<smem>>
    %124 = vector.broadcast %123 : f32 to vector<8x128xf32>
    %125 = arith.mulf %124, %4 : vector<8x128xf32>
    %c22 = arith.constant 22 : index
    %126 = memref.load %arg2[%c22] : memref<48xf32, #tpu.memory_space<smem>>
    %127 = vector.broadcast %126 : f32 to vector<8x128xf32>
    %128 = arith.mulf %127, %7 : vector<8x128xf32>
    %129 = arith.addf %125, %128 : vector<8x128xf32>
    %c23 = arith.constant 23 : index
    %130 = memref.load %arg2[%c23] : memref<48xf32, #tpu.memory_space<smem>>
    %131 = vector.broadcast %130 : f32 to vector<8x128xf32>
    %132 = arith.mulf %131, %10 : vector<8x128xf32>
    %133 = arith.addf %129, %132 : vector<8x128xf32>
    %c7_19 = arith.constant 7 : index
    %134 = memref.load %arg3[%c7_19] : memref<16xf32, #tpu.memory_space<smem>>
    %135 = vector.broadcast %134 : f32 to vector<8x128xf32>
    %136 = arith.addf %133, %135 : vector<8x128xf32>
    %cst_20 = arith.constant 0.000000e+00 : f32
    %137 = vector.broadcast %cst_20 : f32 to vector<8x128xf32>
    %138 = arith.maximumf %136, %137 : vector<8x128xf32>
    %c24 = arith.constant 24 : index
    %139 = memref.load %arg2[%c24] : memref<48xf32, #tpu.memory_space<smem>>
    %140 = vector.broadcast %139 : f32 to vector<8x128xf32>
    %141 = arith.mulf %140, %4 : vector<8x128xf32>
    %c25 = arith.constant 25 : index
    %142 = memref.load %arg2[%c25] : memref<48xf32, #tpu.memory_space<smem>>
    %143 = vector.broadcast %142 : f32 to vector<8x128xf32>
    %144 = arith.mulf %143, %7 : vector<8x128xf32>
    %145 = arith.addf %141, %144 : vector<8x128xf32>
    %c26 = arith.constant 26 : index
    %146 = memref.load %arg2[%c26] : memref<48xf32, #tpu.memory_space<smem>>
    %147 = vector.broadcast %146 : f32 to vector<8x128xf32>
    %148 = arith.mulf %147, %10 : vector<8x128xf32>
    %149 = arith.addf %145, %148 : vector<8x128xf32>
    %c8_21 = arith.constant 8 : index
    %150 = memref.load %arg3[%c8_21] : memref<16xf32, #tpu.memory_space<smem>>
    %151 = vector.broadcast %150 : f32 to vector<8x128xf32>
    %152 = arith.addf %149, %151 : vector<8x128xf32>
    %cst_22 = arith.constant 0.000000e+00 : f32
    %153 = vector.broadcast %cst_22 : f32 to vector<8x128xf32>
    %154 = arith.maximumf %152, %153 : vector<8x128xf32>
    %c27 = arith.constant 27 : index
    %155 = memref.load %arg2[%c27] : memref<48xf32, #tpu.memory_space<smem>>
    %156 = vector.broadcast %155 : f32 to vector<8x128xf32>
    %157 = arith.mulf %156, %4 : vector<8x128xf32>
    %c28 = arith.constant 28 : index
    %158 = memref.load %arg2[%c28] : memref<48xf32, #tpu.memory_space<smem>>
    %159 = vector.broadcast %158 : f32 to vector<8x128xf32>
    %160 = arith.mulf %159, %7 : vector<8x128xf32>
    %161 = arith.addf %157, %160 : vector<8x128xf32>
    %c29 = arith.constant 29 : index
    %162 = memref.load %arg2[%c29] : memref<48xf32, #tpu.memory_space<smem>>
    %163 = vector.broadcast %162 : f32 to vector<8x128xf32>
    %164 = arith.mulf %163, %10 : vector<8x128xf32>
    %165 = arith.addf %161, %164 : vector<8x128xf32>
    %c9_23 = arith.constant 9 : index
    %166 = memref.load %arg3[%c9_23] : memref<16xf32, #tpu.memory_space<smem>>
    %167 = vector.broadcast %166 : f32 to vector<8x128xf32>
    %168 = arith.addf %165, %167 : vector<8x128xf32>
    %cst_24 = arith.constant 0.000000e+00 : f32
    %169 = vector.broadcast %cst_24 : f32 to vector<8x128xf32>
    %170 = arith.maximumf %168, %169 : vector<8x128xf32>
    %c30 = arith.constant 30 : index
    %171 = memref.load %arg2[%c30] : memref<48xf32, #tpu.memory_space<smem>>
    %172 = vector.broadcast %171 : f32 to vector<8x128xf32>
    %173 = arith.mulf %172, %4 : vector<8x128xf32>
    %c31 = arith.constant 31 : index
    %174 = memref.load %arg2[%c31] : memref<48xf32, #tpu.memory_space<smem>>
    %175 = vector.broadcast %174 : f32 to vector<8x128xf32>
    %176 = arith.mulf %175, %7 : vector<8x128xf32>
    %177 = arith.addf %173, %176 : vector<8x128xf32>
    %c32 = arith.constant 32 : index
    %178 = memref.load %arg2[%c32] : memref<48xf32, #tpu.memory_space<smem>>
    %179 = vector.broadcast %178 : f32 to vector<8x128xf32>
    %180 = arith.mulf %179, %10 : vector<8x128xf32>
    %181 = arith.addf %177, %180 : vector<8x128xf32>
    %c10_25 = arith.constant 10 : index
    %182 = memref.load %arg3[%c10_25] : memref<16xf32, #tpu.memory_space<smem>>
    %183 = vector.broadcast %182 : f32 to vector<8x128xf32>
    %184 = arith.addf %181, %183 : vector<8x128xf32>
    %cst_26 = arith.constant 0.000000e+00 : f32
    %185 = vector.broadcast %cst_26 : f32 to vector<8x128xf32>
    %186 = arith.maximumf %184, %185 : vector<8x128xf32>
    %c33 = arith.constant 33 : index
    %187 = memref.load %arg2[%c33] : memref<48xf32, #tpu.memory_space<smem>>
    %188 = vector.broadcast %187 : f32 to vector<8x128xf32>
    %189 = arith.mulf %188, %4 : vector<8x128xf32>
    %c34 = arith.constant 34 : index
    %190 = memref.load %arg2[%c34] : memref<48xf32, #tpu.memory_space<smem>>
    %191 = vector.broadcast %190 : f32 to vector<8x128xf32>
    %192 = arith.mulf %191, %7 : vector<8x128xf32>
    %193 = arith.addf %189, %192 : vector<8x128xf32>
    %c35 = arith.constant 35 : index
    %194 = memref.load %arg2[%c35] : memref<48xf32, #tpu.memory_space<smem>>
    %195 = vector.broadcast %194 : f32 to vector<8x128xf32>
    %196 = arith.mulf %195, %10 : vector<8x128xf32>
    %197 = arith.addf %193, %196 : vector<8x128xf32>
    %c11_27 = arith.constant 11 : index
    %198 = memref.load %arg3[%c11_27] : memref<16xf32, #tpu.memory_space<smem>>
    %199 = vector.broadcast %198 : f32 to vector<8x128xf32>
    %200 = arith.addf %197, %199 : vector<8x128xf32>
    %cst_28 = arith.constant 0.000000e+00 : f32
    %201 = vector.broadcast %cst_28 : f32 to vector<8x128xf32>
    %202 = arith.maximumf %200, %201 : vector<8x128xf32>
    %c36 = arith.constant 36 : index
    %203 = memref.load %arg2[%c36] : memref<48xf32, #tpu.memory_space<smem>>
    %204 = vector.broadcast %203 : f32 to vector<8x128xf32>
    %205 = arith.mulf %204, %4 : vector<8x128xf32>
    %c37 = arith.constant 37 : index
    %206 = memref.load %arg2[%c37] : memref<48xf32, #tpu.memory_space<smem>>
    %207 = vector.broadcast %206 : f32 to vector<8x128xf32>
    %208 = arith.mulf %207, %7 : vector<8x128xf32>
    %209 = arith.addf %205, %208 : vector<8x128xf32>
    %c38 = arith.constant 38 : index
    %210 = memref.load %arg2[%c38] : memref<48xf32, #tpu.memory_space<smem>>
    %211 = vector.broadcast %210 : f32 to vector<8x128xf32>
    %212 = arith.mulf %211, %10 : vector<8x128xf32>
    %213 = arith.addf %209, %212 : vector<8x128xf32>
    %c12_29 = arith.constant 12 : index
    %214 = memref.load %arg3[%c12_29] : memref<16xf32, #tpu.memory_space<smem>>
    %215 = vector.broadcast %214 : f32 to vector<8x128xf32>
    %216 = arith.addf %213, %215 : vector<8x128xf32>
    %cst_30 = arith.constant 0.000000e+00 : f32
    %217 = vector.broadcast %cst_30 : f32 to vector<8x128xf32>
    %218 = arith.maximumf %216, %217 : vector<8x128xf32>
    %c39 = arith.constant 39 : index
    %219 = memref.load %arg2[%c39] : memref<48xf32, #tpu.memory_space<smem>>
    %220 = vector.broadcast %219 : f32 to vector<8x128xf32>
    %221 = arith.mulf %220, %4 : vector<8x128xf32>
    %c40 = arith.constant 40 : index
    %222 = memref.load %arg2[%c40] : memref<48xf32, #tpu.memory_space<smem>>
    %223 = vector.broadcast %222 : f32 to vector<8x128xf32>
    %224 = arith.mulf %223, %7 : vector<8x128xf32>
    %225 = arith.addf %221, %224 : vector<8x128xf32>
    %c41 = arith.constant 41 : index
    %226 = memref.load %arg2[%c41] : memref<48xf32, #tpu.memory_space<smem>>
    %227 = vector.broadcast %226 : f32 to vector<8x128xf32>
    %228 = arith.mulf %227, %10 : vector<8x128xf32>
    %229 = arith.addf %225, %228 : vector<8x128xf32>
    %c13_31 = arith.constant 13 : index
    %230 = memref.load %arg3[%c13_31] : memref<16xf32, #tpu.memory_space<smem>>
    %231 = vector.broadcast %230 : f32 to vector<8x128xf32>
    %232 = arith.addf %229, %231 : vector<8x128xf32>
    %cst_32 = arith.constant 0.000000e+00 : f32
    %233 = vector.broadcast %cst_32 : f32 to vector<8x128xf32>
    %234 = arith.maximumf %232, %233 : vector<8x128xf32>
    %c42 = arith.constant 42 : index
    %235 = memref.load %arg2[%c42] : memref<48xf32, #tpu.memory_space<smem>>
    %236 = vector.broadcast %235 : f32 to vector<8x128xf32>
    %237 = arith.mulf %236, %4 : vector<8x128xf32>
    %c43 = arith.constant 43 : index
    %238 = memref.load %arg2[%c43] : memref<48xf32, #tpu.memory_space<smem>>
    %239 = vector.broadcast %238 : f32 to vector<8x128xf32>
    %240 = arith.mulf %239, %7 : vector<8x128xf32>
    %241 = arith.addf %237, %240 : vector<8x128xf32>
    %c44 = arith.constant 44 : index
    %242 = memref.load %arg2[%c44] : memref<48xf32, #tpu.memory_space<smem>>
    %243 = vector.broadcast %242 : f32 to vector<8x128xf32>
    %244 = arith.mulf %243, %10 : vector<8x128xf32>
    %245 = arith.addf %241, %244 : vector<8x128xf32>
    %c14_33 = arith.constant 14 : index
    %246 = memref.load %arg3[%c14_33] : memref<16xf32, #tpu.memory_space<smem>>
    %247 = vector.broadcast %246 : f32 to vector<8x128xf32>
    %248 = arith.addf %245, %247 : vector<8x128xf32>
    %cst_34 = arith.constant 0.000000e+00 : f32
    %249 = vector.broadcast %cst_34 : f32 to vector<8x128xf32>
    %250 = arith.maximumf %248, %249 : vector<8x128xf32>
    %c45 = arith.constant 45 : index
    %251 = memref.load %arg2[%c45] : memref<48xf32, #tpu.memory_space<smem>>
    %252 = vector.broadcast %251 : f32 to vector<8x128xf32>
    %253 = arith.mulf %252, %4 : vector<8x128xf32>
    %c46 = arith.constant 46 : index
    %254 = memref.load %arg2[%c46] : memref<48xf32, #tpu.memory_space<smem>>
    %255 = vector.broadcast %254 : f32 to vector<8x128xf32>
    %256 = arith.mulf %255, %7 : vector<8x128xf32>
    %257 = arith.addf %253, %256 : vector<8x128xf32>
    %c47 = arith.constant 47 : index
    %258 = memref.load %arg2[%c47] : memref<48xf32, #tpu.memory_space<smem>>
    %259 = vector.broadcast %258 : f32 to vector<8x128xf32>
    %260 = arith.mulf %259, %10 : vector<8x128xf32>
    %261 = arith.addf %257, %260 : vector<8x128xf32>
    %c15_35 = arith.constant 15 : index
    %262 = memref.load %arg3[%c15_35] : memref<16xf32, #tpu.memory_space<smem>>
    %263 = vector.broadcast %262 : f32 to vector<8x128xf32>
    %264 = arith.addf %261, %263 : vector<8x128xf32>
    %cst_36 = arith.constant 0.000000e+00 : f32
    %265 = vector.broadcast %cst_36 : f32 to vector<8x128xf32>
    %266 = arith.maximumf %264, %265 : vector<8x128xf32>
    %c0_37 = arith.constant 0 : index
    %267 = memref.load %arg4[%c0_37] : memref<128xf32, #tpu.memory_space<smem>>
    %268 = vector.broadcast %267 : f32 to vector<8x128xf32>
    %269 = arith.mulf %268, %26 : vector<8x128xf32>
    %c1_38 = arith.constant 1 : index
    %270 = memref.load %arg4[%c1_38] : memref<128xf32, #tpu.memory_space<smem>>
    %271 = vector.broadcast %270 : f32 to vector<8x128xf32>
    %272 = arith.mulf %271, %42 : vector<8x128xf32>
    %273 = arith.addf %269, %272 : vector<8x128xf32>
    %c2_39 = arith.constant 2 : index
    %274 = memref.load %arg4[%c2_39] : memref<128xf32, #tpu.memory_space<smem>>
    %275 = vector.broadcast %274 : f32 to vector<8x128xf32>
    %276 = arith.mulf %275, %58 : vector<8x128xf32>
    %277 = arith.addf %273, %276 : vector<8x128xf32>
    %c3_40 = arith.constant 3 : index
    %278 = memref.load %arg4[%c3_40] : memref<128xf32, #tpu.memory_space<smem>>
    %279 = vector.broadcast %278 : f32 to vector<8x128xf32>
    %280 = arith.mulf %279, %74 : vector<8x128xf32>
    %281 = arith.addf %277, %280 : vector<8x128xf32>
    %c4_41 = arith.constant 4 : index
    %282 = memref.load %arg4[%c4_41] : memref<128xf32, #tpu.memory_space<smem>>
    %283 = vector.broadcast %282 : f32 to vector<8x128xf32>
    %284 = arith.mulf %283, %90 : vector<8x128xf32>
    %285 = arith.addf %281, %284 : vector<8x128xf32>
    %c5_42 = arith.constant 5 : index
    %286 = memref.load %arg4[%c5_42] : memref<128xf32, #tpu.memory_space<smem>>
    %287 = vector.broadcast %286 : f32 to vector<8x128xf32>
    %288 = arith.mulf %287, %106 : vector<8x128xf32>
    %289 = arith.addf %285, %288 : vector<8x128xf32>
    %c6_43 = arith.constant 6 : index
    %290 = memref.load %arg4[%c6_43] : memref<128xf32, #tpu.memory_space<smem>>
    %291 = vector.broadcast %290 : f32 to vector<8x128xf32>
    %292 = arith.mulf %291, %122 : vector<8x128xf32>
    %293 = arith.addf %289, %292 : vector<8x128xf32>
    %c7_44 = arith.constant 7 : index
    %294 = memref.load %arg4[%c7_44] : memref<128xf32, #tpu.memory_space<smem>>
    %295 = vector.broadcast %294 : f32 to vector<8x128xf32>
    %296 = arith.mulf %295, %138 : vector<8x128xf32>
    %297 = arith.addf %293, %296 : vector<8x128xf32>
    %c8_45 = arith.constant 8 : index
    %298 = memref.load %arg4[%c8_45] : memref<128xf32, #tpu.memory_space<smem>>
    %299 = vector.broadcast %298 : f32 to vector<8x128xf32>
    %300 = arith.mulf %299, %154 : vector<8x128xf32>
    %301 = arith.addf %297, %300 : vector<8x128xf32>
    %c9_46 = arith.constant 9 : index
    %302 = memref.load %arg4[%c9_46] : memref<128xf32, #tpu.memory_space<smem>>
    %303 = vector.broadcast %302 : f32 to vector<8x128xf32>
    %304 = arith.mulf %303, %170 : vector<8x128xf32>
    %305 = arith.addf %301, %304 : vector<8x128xf32>
    %c10_47 = arith.constant 10 : index
    %306 = memref.load %arg4[%c10_47] : memref<128xf32, #tpu.memory_space<smem>>
    %307 = vector.broadcast %306 : f32 to vector<8x128xf32>
    %308 = arith.mulf %307, %186 : vector<8x128xf32>
    %309 = arith.addf %305, %308 : vector<8x128xf32>
    %c11_48 = arith.constant 11 : index
    %310 = memref.load %arg4[%c11_48] : memref<128xf32, #tpu.memory_space<smem>>
    %311 = vector.broadcast %310 : f32 to vector<8x128xf32>
    %312 = arith.mulf %311, %202 : vector<8x128xf32>
    %313 = arith.addf %309, %312 : vector<8x128xf32>
    %c12_49 = arith.constant 12 : index
    %314 = memref.load %arg4[%c12_49] : memref<128xf32, #tpu.memory_space<smem>>
    %315 = vector.broadcast %314 : f32 to vector<8x128xf32>
    %316 = arith.mulf %315, %218 : vector<8x128xf32>
    %317 = arith.addf %313, %316 : vector<8x128xf32>
    %c13_50 = arith.constant 13 : index
    %318 = memref.load %arg4[%c13_50] : memref<128xf32, #tpu.memory_space<smem>>
    %319 = vector.broadcast %318 : f32 to vector<8x128xf32>
    %320 = arith.mulf %319, %234 : vector<8x128xf32>
    %321 = arith.addf %317, %320 : vector<8x128xf32>
    %c14_51 = arith.constant 14 : index
    %322 = memref.load %arg4[%c14_51] : memref<128xf32, #tpu.memory_space<smem>>
    %323 = vector.broadcast %322 : f32 to vector<8x128xf32>
    %324 = arith.mulf %323, %250 : vector<8x128xf32>
    %325 = arith.addf %321, %324 : vector<8x128xf32>
    %c15_52 = arith.constant 15 : index
    %326 = memref.load %arg4[%c15_52] : memref<128xf32, #tpu.memory_space<smem>>
    %327 = vector.broadcast %326 : f32 to vector<8x128xf32>
    %328 = arith.mulf %327, %266 : vector<8x128xf32>
    %329 = arith.addf %325, %328 : vector<8x128xf32>
    %c0_53 = arith.constant 0 : index
    %330 = memref.load %arg5[%c0_53] : memref<8xf32, #tpu.memory_space<smem>>
    %331 = vector.broadcast %330 : f32 to vector<8x128xf32>
    %332 = arith.addf %329, %331 : vector<8x128xf32>
    %cst_54 = arith.constant 0.000000e+00 : f32
    %333 = vector.broadcast %cst_54 : f32 to vector<8x128xf32>
    %334 = arith.maximumf %332, %333 : vector<8x128xf32>
    %c16_55 = arith.constant 16 : index
    %335 = memref.load %arg4[%c16_55] : memref<128xf32, #tpu.memory_space<smem>>
    %336 = vector.broadcast %335 : f32 to vector<8x128xf32>
    %337 = arith.mulf %336, %26 : vector<8x128xf32>
    %c17_56 = arith.constant 17 : index
    %338 = memref.load %arg4[%c17_56] : memref<128xf32, #tpu.memory_space<smem>>
    %339 = vector.broadcast %338 : f32 to vector<8x128xf32>
    %340 = arith.mulf %339, %42 : vector<8x128xf32>
    %341 = arith.addf %337, %340 : vector<8x128xf32>
    %c18_57 = arith.constant 18 : index
    %342 = memref.load %arg4[%c18_57] : memref<128xf32, #tpu.memory_space<smem>>
    %343 = vector.broadcast %342 : f32 to vector<8x128xf32>
    %344 = arith.mulf %343, %58 : vector<8x128xf32>
    %345 = arith.addf %341, %344 : vector<8x128xf32>
    %c19_58 = arith.constant 19 : index
    %346 = memref.load %arg4[%c19_58] : memref<128xf32, #tpu.memory_space<smem>>
    %347 = vector.broadcast %346 : f32 to vector<8x128xf32>
    %348 = arith.mulf %347, %74 : vector<8x128xf32>
    %349 = arith.addf %345, %348 : vector<8x128xf32>
    %c20_59 = arith.constant 20 : index
    %350 = memref.load %arg4[%c20_59] : memref<128xf32, #tpu.memory_space<smem>>
    %351 = vector.broadcast %350 : f32 to vector<8x128xf32>
    %352 = arith.mulf %351, %90 : vector<8x128xf32>
    %353 = arith.addf %349, %352 : vector<8x128xf32>
    %c21_60 = arith.constant 21 : index
    %354 = memref.load %arg4[%c21_60] : memref<128xf32, #tpu.memory_space<smem>>
    %355 = vector.broadcast %354 : f32 to vector<8x128xf32>
    %356 = arith.mulf %355, %106 : vector<8x128xf32>
    %357 = arith.addf %353, %356 : vector<8x128xf32>
    %c22_61 = arith.constant 22 : index
    %358 = memref.load %arg4[%c22_61] : memref<128xf32, #tpu.memory_space<smem>>
    %359 = vector.broadcast %358 : f32 to vector<8x128xf32>
    %360 = arith.mulf %359, %122 : vector<8x128xf32>
    %361 = arith.addf %357, %360 : vector<8x128xf32>
    %c23_62 = arith.constant 23 : index
    %362 = memref.load %arg4[%c23_62] : memref<128xf32, #tpu.memory_space<smem>>
    %363 = vector.broadcast %362 : f32 to vector<8x128xf32>
    %364 = arith.mulf %363, %138 : vector<8x128xf32>
    %365 = arith.addf %361, %364 : vector<8x128xf32>
    %c24_63 = arith.constant 24 : index
    %366 = memref.load %arg4[%c24_63] : memref<128xf32, #tpu.memory_space<smem>>
    %367 = vector.broadcast %366 : f32 to vector<8x128xf32>
    %368 = arith.mulf %367, %154 : vector<8x128xf32>
    %369 = arith.addf %365, %368 : vector<8x128xf32>
    %c25_64 = arith.constant 25 : index
    %370 = memref.load %arg4[%c25_64] : memref<128xf32, #tpu.memory_space<smem>>
    %371 = vector.broadcast %370 : f32 to vector<8x128xf32>
    %372 = arith.mulf %371, %170 : vector<8x128xf32>
    %373 = arith.addf %369, %372 : vector<8x128xf32>
    %c26_65 = arith.constant 26 : index
    %374 = memref.load %arg4[%c26_65] : memref<128xf32, #tpu.memory_space<smem>>
    %375 = vector.broadcast %374 : f32 to vector<8x128xf32>
    %376 = arith.mulf %375, %186 : vector<8x128xf32>
    %377 = arith.addf %373, %376 : vector<8x128xf32>
    %c27_66 = arith.constant 27 : index
    %378 = memref.load %arg4[%c27_66] : memref<128xf32, #tpu.memory_space<smem>>
    %379 = vector.broadcast %378 : f32 to vector<8x128xf32>
    %380 = arith.mulf %379, %202 : vector<8x128xf32>
    %381 = arith.addf %377, %380 : vector<8x128xf32>
    %c28_67 = arith.constant 28 : index
    %382 = memref.load %arg4[%c28_67] : memref<128xf32, #tpu.memory_space<smem>>
    %383 = vector.broadcast %382 : f32 to vector<8x128xf32>
    %384 = arith.mulf %383, %218 : vector<8x128xf32>
    %385 = arith.addf %381, %384 : vector<8x128xf32>
    %c29_68 = arith.constant 29 : index
    %386 = memref.load %arg4[%c29_68] : memref<128xf32, #tpu.memory_space<smem>>
    %387 = vector.broadcast %386 : f32 to vector<8x128xf32>
    %388 = arith.mulf %387, %234 : vector<8x128xf32>
    %389 = arith.addf %385, %388 : vector<8x128xf32>
    %c30_69 = arith.constant 30 : index
    %390 = memref.load %arg4[%c30_69] : memref<128xf32, #tpu.memory_space<smem>>
    %391 = vector.broadcast %390 : f32 to vector<8x128xf32>
    %392 = arith.mulf %391, %250 : vector<8x128xf32>
    %393 = arith.addf %389, %392 : vector<8x128xf32>
    %c31_70 = arith.constant 31 : index
    %394 = memref.load %arg4[%c31_70] : memref<128xf32, #tpu.memory_space<smem>>
    %395 = vector.broadcast %394 : f32 to vector<8x128xf32>
    %396 = arith.mulf %395, %266 : vector<8x128xf32>
    %397 = arith.addf %393, %396 : vector<8x128xf32>
    %c1_71 = arith.constant 1 : index
    %398 = memref.load %arg5[%c1_71] : memref<8xf32, #tpu.memory_space<smem>>
    %399 = vector.broadcast %398 : f32 to vector<8x128xf32>
    %400 = arith.addf %397, %399 : vector<8x128xf32>
    %cst_72 = arith.constant 0.000000e+00 : f32
    %401 = vector.broadcast %cst_72 : f32 to vector<8x128xf32>
    %402 = arith.maximumf %400, %401 : vector<8x128xf32>
    %c32_73 = arith.constant 32 : index
    %403 = memref.load %arg4[%c32_73] : memref<128xf32, #tpu.memory_space<smem>>
    %404 = vector.broadcast %403 : f32 to vector<8x128xf32>
    %405 = arith.mulf %404, %26 : vector<8x128xf32>
    %c33_74 = arith.constant 33 : index
    %406 = memref.load %arg4[%c33_74] : memref<128xf32, #tpu.memory_space<smem>>
    %407 = vector.broadcast %406 : f32 to vector<8x128xf32>
    %408 = arith.mulf %407, %42 : vector<8x128xf32>
    %409 = arith.addf %405, %408 : vector<8x128xf32>
    %c34_75 = arith.constant 34 : index
    %410 = memref.load %arg4[%c34_75] : memref<128xf32, #tpu.memory_space<smem>>
    %411 = vector.broadcast %410 : f32 to vector<8x128xf32>
    %412 = arith.mulf %411, %58 : vector<8x128xf32>
    %413 = arith.addf %409, %412 : vector<8x128xf32>
    %c35_76 = arith.constant 35 : index
    %414 = memref.load %arg4[%c35_76] : memref<128xf32, #tpu.memory_space<smem>>
    %415 = vector.broadcast %414 : f32 to vector<8x128xf32>
    %416 = arith.mulf %415, %74 : vector<8x128xf32>
    %417 = arith.addf %413, %416 : vector<8x128xf32>
    %c36_77 = arith.constant 36 : index
    %418 = memref.load %arg4[%c36_77] : memref<128xf32, #tpu.memory_space<smem>>
    %419 = vector.broadcast %418 : f32 to vector<8x128xf32>
    %420 = arith.mulf %419, %90 : vector<8x128xf32>
    %421 = arith.addf %417, %420 : vector<8x128xf32>
    %c37_78 = arith.constant 37 : index
    %422 = memref.load %arg4[%c37_78] : memref<128xf32, #tpu.memory_space<smem>>
    %423 = vector.broadcast %422 : f32 to vector<8x128xf32>
    %424 = arith.mulf %423, %106 : vector<8x128xf32>
    %425 = arith.addf %421, %424 : vector<8x128xf32>
    %c38_79 = arith.constant 38 : index
    %426 = memref.load %arg4[%c38_79] : memref<128xf32, #tpu.memory_space<smem>>
    %427 = vector.broadcast %426 : f32 to vector<8x128xf32>
    %428 = arith.mulf %427, %122 : vector<8x128xf32>
    %429 = arith.addf %425, %428 : vector<8x128xf32>
    %c39_80 = arith.constant 39 : index
    %430 = memref.load %arg4[%c39_80] : memref<128xf32, #tpu.memory_space<smem>>
    %431 = vector.broadcast %430 : f32 to vector<8x128xf32>
    %432 = arith.mulf %431, %138 : vector<8x128xf32>
    %433 = arith.addf %429, %432 : vector<8x128xf32>
    %c40_81 = arith.constant 40 : index
    %434 = memref.load %arg4[%c40_81] : memref<128xf32, #tpu.memory_space<smem>>
    %435 = vector.broadcast %434 : f32 to vector<8x128xf32>
    %436 = arith.mulf %435, %154 : vector<8x128xf32>
    %437 = arith.addf %433, %436 : vector<8x128xf32>
    %c41_82 = arith.constant 41 : index
    %438 = memref.load %arg4[%c41_82] : memref<128xf32, #tpu.memory_space<smem>>
    %439 = vector.broadcast %438 : f32 to vector<8x128xf32>
    %440 = arith.mulf %439, %170 : vector<8x128xf32>
    %441 = arith.addf %437, %440 : vector<8x128xf32>
    %c42_83 = arith.constant 42 : index
    %442 = memref.load %arg4[%c42_83] : memref<128xf32, #tpu.memory_space<smem>>
    %443 = vector.broadcast %442 : f32 to vector<8x128xf32>
    %444 = arith.mulf %443, %186 : vector<8x128xf32>
    %445 = arith.addf %441, %444 : vector<8x128xf32>
    %c43_84 = arith.constant 43 : index
    %446 = memref.load %arg4[%c43_84] : memref<128xf32, #tpu.memory_space<smem>>
    %447 = vector.broadcast %446 : f32 to vector<8x128xf32>
    %448 = arith.mulf %447, %202 : vector<8x128xf32>
    %449 = arith.addf %445, %448 : vector<8x128xf32>
    %c44_85 = arith.constant 44 : index
    %450 = memref.load %arg4[%c44_85] : memref<128xf32, #tpu.memory_space<smem>>
    %451 = vector.broadcast %450 : f32 to vector<8x128xf32>
    %452 = arith.mulf %451, %218 : vector<8x128xf32>
    %453 = arith.addf %449, %452 : vector<8x128xf32>
    %c45_86 = arith.constant 45 : index
    %454 = memref.load %arg4[%c45_86] : memref<128xf32, #tpu.memory_space<smem>>
    %455 = vector.broadcast %454 : f32 to vector<8x128xf32>
    %456 = arith.mulf %455, %234 : vector<8x128xf32>
    %457 = arith.addf %453, %456 : vector<8x128xf32>
    %c46_87 = arith.constant 46 : index
    %458 = memref.load %arg4[%c46_87] : memref<128xf32, #tpu.memory_space<smem>>
    %459 = vector.broadcast %458 : f32 to vector<8x128xf32>
    %460 = arith.mulf %459, %250 : vector<8x128xf32>
    %461 = arith.addf %457, %460 : vector<8x128xf32>
    %c47_88 = arith.constant 47 : index
    %462 = memref.load %arg4[%c47_88] : memref<128xf32, #tpu.memory_space<smem>>
    %463 = vector.broadcast %462 : f32 to vector<8x128xf32>
    %464 = arith.mulf %463, %266 : vector<8x128xf32>
    %465 = arith.addf %461, %464 : vector<8x128xf32>
    %c2_89 = arith.constant 2 : index
    %466 = memref.load %arg5[%c2_89] : memref<8xf32, #tpu.memory_space<smem>>
    %467 = vector.broadcast %466 : f32 to vector<8x128xf32>
    %468 = arith.addf %465, %467 : vector<8x128xf32>
    %cst_90 = arith.constant 0.000000e+00 : f32
    %469 = vector.broadcast %cst_90 : f32 to vector<8x128xf32>
    %470 = arith.maximumf %468, %469 : vector<8x128xf32>
    %c48 = arith.constant 48 : index
    %471 = memref.load %arg4[%c48] : memref<128xf32, #tpu.memory_space<smem>>
    %472 = vector.broadcast %471 : f32 to vector<8x128xf32>
    %473 = arith.mulf %472, %26 : vector<8x128xf32>
    %c49 = arith.constant 49 : index
    %474 = memref.load %arg4[%c49] : memref<128xf32, #tpu.memory_space<smem>>
    %475 = vector.broadcast %474 : f32 to vector<8x128xf32>
    %476 = arith.mulf %475, %42 : vector<8x128xf32>
    %477 = arith.addf %473, %476 : vector<8x128xf32>
    %c50 = arith.constant 50 : index
    %478 = memref.load %arg4[%c50] : memref<128xf32, #tpu.memory_space<smem>>
    %479 = vector.broadcast %478 : f32 to vector<8x128xf32>
    %480 = arith.mulf %479, %58 : vector<8x128xf32>
    %481 = arith.addf %477, %480 : vector<8x128xf32>
    %c51 = arith.constant 51 : index
    %482 = memref.load %arg4[%c51] : memref<128xf32, #tpu.memory_space<smem>>
    %483 = vector.broadcast %482 : f32 to vector<8x128xf32>
    %484 = arith.mulf %483, %74 : vector<8x128xf32>
    %485 = arith.addf %481, %484 : vector<8x128xf32>
    %c52 = arith.constant 52 : index
    %486 = memref.load %arg4[%c52] : memref<128xf32, #tpu.memory_space<smem>>
    %487 = vector.broadcast %486 : f32 to vector<8x128xf32>
    %488 = arith.mulf %487, %90 : vector<8x128xf32>
    %489 = arith.addf %485, %488 : vector<8x128xf32>
    %c53 = arith.constant 53 : index
    %490 = memref.load %arg4[%c53] : memref<128xf32, #tpu.memory_space<smem>>
    %491 = vector.broadcast %490 : f32 to vector<8x128xf32>
    %492 = arith.mulf %491, %106 : vector<8x128xf32>
    %493 = arith.addf %489, %492 : vector<8x128xf32>
    %c54 = arith.constant 54 : index
    %494 = memref.load %arg4[%c54] : memref<128xf32, #tpu.memory_space<smem>>
    %495 = vector.broadcast %494 : f32 to vector<8x128xf32>
    %496 = arith.mulf %495, %122 : vector<8x128xf32>
    %497 = arith.addf %493, %496 : vector<8x128xf32>
    %c55 = arith.constant 55 : index
    %498 = memref.load %arg4[%c55] : memref<128xf32, #tpu.memory_space<smem>>
    %499 = vector.broadcast %498 : f32 to vector<8x128xf32>
    %500 = arith.mulf %499, %138 : vector<8x128xf32>
    %501 = arith.addf %497, %500 : vector<8x128xf32>
    %c56 = arith.constant 56 : index
    %502 = memref.load %arg4[%c56] : memref<128xf32, #tpu.memory_space<smem>>
    %503 = vector.broadcast %502 : f32 to vector<8x128xf32>
    %504 = arith.mulf %503, %154 : vector<8x128xf32>
    %505 = arith.addf %501, %504 : vector<8x128xf32>
    %c57 = arith.constant 57 : index
    %506 = memref.load %arg4[%c57] : memref<128xf32, #tpu.memory_space<smem>>
    %507 = vector.broadcast %506 : f32 to vector<8x128xf32>
    %508 = arith.mulf %507, %170 : vector<8x128xf32>
    %509 = arith.addf %505, %508 : vector<8x128xf32>
    %c58 = arith.constant 58 : index
    %510 = memref.load %arg4[%c58] : memref<128xf32, #tpu.memory_space<smem>>
    %511 = vector.broadcast %510 : f32 to vector<8x128xf32>
    %512 = arith.mulf %511, %186 : vector<8x128xf32>
    %513 = arith.addf %509, %512 : vector<8x128xf32>
    %c59 = arith.constant 59 : index
    %514 = memref.load %arg4[%c59] : memref<128xf32, #tpu.memory_space<smem>>
    %515 = vector.broadcast %514 : f32 to vector<8x128xf32>
    %516 = arith.mulf %515, %202 : vector<8x128xf32>
    %517 = arith.addf %513, %516 : vector<8x128xf32>
    %c60 = arith.constant 60 : index
    %518 = memref.load %arg4[%c60] : memref<128xf32, #tpu.memory_space<smem>>
    %519 = vector.broadcast %518 : f32 to vector<8x128xf32>
    %520 = arith.mulf %519, %218 : vector<8x128xf32>
    %521 = arith.addf %517, %520 : vector<8x128xf32>
    %c61 = arith.constant 61 : index
    %522 = memref.load %arg4[%c61] : memref<128xf32, #tpu.memory_space<smem>>
    %523 = vector.broadcast %522 : f32 to vector<8x128xf32>
    %524 = arith.mulf %523, %234 : vector<8x128xf32>
    %525 = arith.addf %521, %524 : vector<8x128xf32>
    %c62 = arith.constant 62 : index
    %526 = memref.load %arg4[%c62] : memref<128xf32, #tpu.memory_space<smem>>
    %527 = vector.broadcast %526 : f32 to vector<8x128xf32>
    %528 = arith.mulf %527, %250 : vector<8x128xf32>
    %529 = arith.addf %525, %528 : vector<8x128xf32>
    %c63 = arith.constant 63 : index
    %530 = memref.load %arg4[%c63] : memref<128xf32, #tpu.memory_space<smem>>
    %531 = vector.broadcast %530 : f32 to vector<8x128xf32>
    %532 = arith.mulf %531, %266 : vector<8x128xf32>
    %533 = arith.addf %529, %532 : vector<8x128xf32>
    %c3_91 = arith.constant 3 : index
    %534 = memref.load %arg5[%c3_91] : memref<8xf32, #tpu.memory_space<smem>>
    %535 = vector.broadcast %534 : f32 to vector<8x128xf32>
    %536 = arith.addf %533, %535 : vector<8x128xf32>
    %cst_92 = arith.constant 0.000000e+00 : f32
    %537 = vector.broadcast %cst_92 : f32 to vector<8x128xf32>
    %538 = arith.maximumf %536, %537 : vector<8x128xf32>
    %c64 = arith.constant 64 : index
    %539 = memref.load %arg4[%c64] : memref<128xf32, #tpu.memory_space<smem>>
    %540 = vector.broadcast %539 : f32 to vector<8x128xf32>
    %541 = arith.mulf %540, %26 : vector<8x128xf32>
    %c65 = arith.constant 65 : index
    %542 = memref.load %arg4[%c65] : memref<128xf32, #tpu.memory_space<smem>>
    %543 = vector.broadcast %542 : f32 to vector<8x128xf32>
    %544 = arith.mulf %543, %42 : vector<8x128xf32>
    %545 = arith.addf %541, %544 : vector<8x128xf32>
    %c66 = arith.constant 66 : index
    %546 = memref.load %arg4[%c66] : memref<128xf32, #tpu.memory_space<smem>>
    %547 = vector.broadcast %546 : f32 to vector<8x128xf32>
    %548 = arith.mulf %547, %58 : vector<8x128xf32>
    %549 = arith.addf %545, %548 : vector<8x128xf32>
    %c67 = arith.constant 67 : index
    %550 = memref.load %arg4[%c67] : memref<128xf32, #tpu.memory_space<smem>>
    %551 = vector.broadcast %550 : f32 to vector<8x128xf32>
    %552 = arith.mulf %551, %74 : vector<8x128xf32>
    %553 = arith.addf %549, %552 : vector<8x128xf32>
    %c68 = arith.constant 68 : index
    %554 = memref.load %arg4[%c68] : memref<128xf32, #tpu.memory_space<smem>>
    %555 = vector.broadcast %554 : f32 to vector<8x128xf32>
    %556 = arith.mulf %555, %90 : vector<8x128xf32>
    %557 = arith.addf %553, %556 : vector<8x128xf32>
    %c69 = arith.constant 69 : index
    %558 = memref.load %arg4[%c69] : memref<128xf32, #tpu.memory_space<smem>>
    %559 = vector.broadcast %558 : f32 to vector<8x128xf32>
    %560 = arith.mulf %559, %106 : vector<8x128xf32>
    %561 = arith.addf %557, %560 : vector<8x128xf32>
    %c70 = arith.constant 70 : index
    %562 = memref.load %arg4[%c70] : memref<128xf32, #tpu.memory_space<smem>>
    %563 = vector.broadcast %562 : f32 to vector<8x128xf32>
    %564 = arith.mulf %563, %122 : vector<8x128xf32>
    %565 = arith.addf %561, %564 : vector<8x128xf32>
    %c71 = arith.constant 71 : index
    %566 = memref.load %arg4[%c71] : memref<128xf32, #tpu.memory_space<smem>>
    %567 = vector.broadcast %566 : f32 to vector<8x128xf32>
    %568 = arith.mulf %567, %138 : vector<8x128xf32>
    %569 = arith.addf %565, %568 : vector<8x128xf32>
    %c72 = arith.constant 72 : index
    %570 = memref.load %arg4[%c72] : memref<128xf32, #tpu.memory_space<smem>>
    %571 = vector.broadcast %570 : f32 to vector<8x128xf32>
    %572 = arith.mulf %571, %154 : vector<8x128xf32>
    %573 = arith.addf %569, %572 : vector<8x128xf32>
    %c73 = arith.constant 73 : index
    %574 = memref.load %arg4[%c73] : memref<128xf32, #tpu.memory_space<smem>>
    %575 = vector.broadcast %574 : f32 to vector<8x128xf32>
    %576 = arith.mulf %575, %170 : vector<8x128xf32>
    %577 = arith.addf %573, %576 : vector<8x128xf32>
    %c74 = arith.constant 74 : index
    %578 = memref.load %arg4[%c74] : memref<128xf32, #tpu.memory_space<smem>>
    %579 = vector.broadcast %578 : f32 to vector<8x128xf32>
    %580 = arith.mulf %579, %186 : vector<8x128xf32>
    %581 = arith.addf %577, %580 : vector<8x128xf32>
    %c75 = arith.constant 75 : index
    %582 = memref.load %arg4[%c75] : memref<128xf32, #tpu.memory_space<smem>>
    %583 = vector.broadcast %582 : f32 to vector<8x128xf32>
    %584 = arith.mulf %583, %202 : vector<8x128xf32>
    %585 = arith.addf %581, %584 : vector<8x128xf32>
    %c76 = arith.constant 76 : index
    %586 = memref.load %arg4[%c76] : memref<128xf32, #tpu.memory_space<smem>>
    %587 = vector.broadcast %586 : f32 to vector<8x128xf32>
    %588 = arith.mulf %587, %218 : vector<8x128xf32>
    %589 = arith.addf %585, %588 : vector<8x128xf32>
    %c77 = arith.constant 77 : index
    %590 = memref.load %arg4[%c77] : memref<128xf32, #tpu.memory_space<smem>>
    %591 = vector.broadcast %590 : f32 to vector<8x128xf32>
    %592 = arith.mulf %591, %234 : vector<8x128xf32>
    %593 = arith.addf %589, %592 : vector<8x128xf32>
    %c78 = arith.constant 78 : index
    %594 = memref.load %arg4[%c78] : memref<128xf32, #tpu.memory_space<smem>>
    %595 = vector.broadcast %594 : f32 to vector<8x128xf32>
    %596 = arith.mulf %595, %250 : vector<8x128xf32>
    %597 = arith.addf %593, %596 : vector<8x128xf32>
    %c79 = arith.constant 79 : index
    %598 = memref.load %arg4[%c79] : memref<128xf32, #tpu.memory_space<smem>>
    %599 = vector.broadcast %598 : f32 to vector<8x128xf32>
    %600 = arith.mulf %599, %266 : vector<8x128xf32>
    %601 = arith.addf %597, %600 : vector<8x128xf32>
    %c4_93 = arith.constant 4 : index
    %602 = memref.load %arg5[%c4_93] : memref<8xf32, #tpu.memory_space<smem>>
    %603 = vector.broadcast %602 : f32 to vector<8x128xf32>
    %604 = arith.addf %601, %603 : vector<8x128xf32>
    %cst_94 = arith.constant 0.000000e+00 : f32
    %605 = vector.broadcast %cst_94 : f32 to vector<8x128xf32>
    %606 = arith.maximumf %604, %605 : vector<8x128xf32>
    %c80 = arith.constant 80 : index
    %607 = memref.load %arg4[%c80] : memref<128xf32, #tpu.memory_space<smem>>
    %608 = vector.broadcast %607 : f32 to vector<8x128xf32>
    %609 = arith.mulf %608, %26 : vector<8x128xf32>
    %c81 = arith.constant 81 : index
    %610 = memref.load %arg4[%c81] : memref<128xf32, #tpu.memory_space<smem>>
    %611 = vector.broadcast %610 : f32 to vector<8x128xf32>
    %612 = arith.mulf %611, %42 : vector<8x128xf32>
    %613 = arith.addf %609, %612 : vector<8x128xf32>
    %c82 = arith.constant 82 : index
    %614 = memref.load %arg4[%c82] : memref<128xf32, #tpu.memory_space<smem>>
    %615 = vector.broadcast %614 : f32 to vector<8x128xf32>
    %616 = arith.mulf %615, %58 : vector<8x128xf32>
    %617 = arith.addf %613, %616 : vector<8x128xf32>
    %c83 = arith.constant 83 : index
    %618 = memref.load %arg4[%c83] : memref<128xf32, #tpu.memory_space<smem>>
    %619 = vector.broadcast %618 : f32 to vector<8x128xf32>
    %620 = arith.mulf %619, %74 : vector<8x128xf32>
    %621 = arith.addf %617, %620 : vector<8x128xf32>
    %c84 = arith.constant 84 : index
    %622 = memref.load %arg4[%c84] : memref<128xf32, #tpu.memory_space<smem>>
    %623 = vector.broadcast %622 : f32 to vector<8x128xf32>
    %624 = arith.mulf %623, %90 : vector<8x128xf32>
    %625 = arith.addf %621, %624 : vector<8x128xf32>
    %c85 = arith.constant 85 : index
    %626 = memref.load %arg4[%c85] : memref<128xf32, #tpu.memory_space<smem>>
    %627 = vector.broadcast %626 : f32 to vector<8x128xf32>
    %628 = arith.mulf %627, %106 : vector<8x128xf32>
    %629 = arith.addf %625, %628 : vector<8x128xf32>
    %c86 = arith.constant 86 : index
    %630 = memref.load %arg4[%c86] : memref<128xf32, #tpu.memory_space<smem>>
    %631 = vector.broadcast %630 : f32 to vector<8x128xf32>
    %632 = arith.mulf %631, %122 : vector<8x128xf32>
    %633 = arith.addf %629, %632 : vector<8x128xf32>
    %c87 = arith.constant 87 : index
    %634 = memref.load %arg4[%c87] : memref<128xf32, #tpu.memory_space<smem>>
    %635 = vector.broadcast %634 : f32 to vector<8x128xf32>
    %636 = arith.mulf %635, %138 : vector<8x128xf32>
    %637 = arith.addf %633, %636 : vector<8x128xf32>
    %c88 = arith.constant 88 : index
    %638 = memref.load %arg4[%c88] : memref<128xf32, #tpu.memory_space<smem>>
    %639 = vector.broadcast %638 : f32 to vector<8x128xf32>
    %640 = arith.mulf %639, %154 : vector<8x128xf32>
    %641 = arith.addf %637, %640 : vector<8x128xf32>
    %c89 = arith.constant 89 : index
    %642 = memref.load %arg4[%c89] : memref<128xf32, #tpu.memory_space<smem>>
    %643 = vector.broadcast %642 : f32 to vector<8x128xf32>
    %644 = arith.mulf %643, %170 : vector<8x128xf32>
    %645 = arith.addf %641, %644 : vector<8x128xf32>
    %c90 = arith.constant 90 : index
    %646 = memref.load %arg4[%c90] : memref<128xf32, #tpu.memory_space<smem>>
    %647 = vector.broadcast %646 : f32 to vector<8x128xf32>
    %648 = arith.mulf %647, %186 : vector<8x128xf32>
    %649 = arith.addf %645, %648 : vector<8x128xf32>
    %c91 = arith.constant 91 : index
    %650 = memref.load %arg4[%c91] : memref<128xf32, #tpu.memory_space<smem>>
    %651 = vector.broadcast %650 : f32 to vector<8x128xf32>
    %652 = arith.mulf %651, %202 : vector<8x128xf32>
    %653 = arith.addf %649, %652 : vector<8x128xf32>
    %c92 = arith.constant 92 : index
    %654 = memref.load %arg4[%c92] : memref<128xf32, #tpu.memory_space<smem>>
    %655 = vector.broadcast %654 : f32 to vector<8x128xf32>
    %656 = arith.mulf %655, %218 : vector<8x128xf32>
    %657 = arith.addf %653, %656 : vector<8x128xf32>
    %c93 = arith.constant 93 : index
    %658 = memref.load %arg4[%c93] : memref<128xf32, #tpu.memory_space<smem>>
    %659 = vector.broadcast %658 : f32 to vector<8x128xf32>
    %660 = arith.mulf %659, %234 : vector<8x128xf32>
    %661 = arith.addf %657, %660 : vector<8x128xf32>
    %c94 = arith.constant 94 : index
    %662 = memref.load %arg4[%c94] : memref<128xf32, #tpu.memory_space<smem>>
    %663 = vector.broadcast %662 : f32 to vector<8x128xf32>
    %664 = arith.mulf %663, %250 : vector<8x128xf32>
    %665 = arith.addf %661, %664 : vector<8x128xf32>
    %c95 = arith.constant 95 : index
    %666 = memref.load %arg4[%c95] : memref<128xf32, #tpu.memory_space<smem>>
    %667 = vector.broadcast %666 : f32 to vector<8x128xf32>
    %668 = arith.mulf %667, %266 : vector<8x128xf32>
    %669 = arith.addf %665, %668 : vector<8x128xf32>
    %c5_95 = arith.constant 5 : index
    %670 = memref.load %arg5[%c5_95] : memref<8xf32, #tpu.memory_space<smem>>
    %671 = vector.broadcast %670 : f32 to vector<8x128xf32>
    %672 = arith.addf %669, %671 : vector<8x128xf32>
    %cst_96 = arith.constant 0.000000e+00 : f32
    %673 = vector.broadcast %cst_96 : f32 to vector<8x128xf32>
    %674 = arith.maximumf %672, %673 : vector<8x128xf32>
    %c96 = arith.constant 96 : index
    %675 = memref.load %arg4[%c96] : memref<128xf32, #tpu.memory_space<smem>>
    %676 = vector.broadcast %675 : f32 to vector<8x128xf32>
    %677 = arith.mulf %676, %26 : vector<8x128xf32>
    %c97 = arith.constant 97 : index
    %678 = memref.load %arg4[%c97] : memref<128xf32, #tpu.memory_space<smem>>
    %679 = vector.broadcast %678 : f32 to vector<8x128xf32>
    %680 = arith.mulf %679, %42 : vector<8x128xf32>
    %681 = arith.addf %677, %680 : vector<8x128xf32>
    %c98 = arith.constant 98 : index
    %682 = memref.load %arg4[%c98] : memref<128xf32, #tpu.memory_space<smem>>
    %683 = vector.broadcast %682 : f32 to vector<8x128xf32>
    %684 = arith.mulf %683, %58 : vector<8x128xf32>
    %685 = arith.addf %681, %684 : vector<8x128xf32>
    %c99 = arith.constant 99 : index
    %686 = memref.load %arg4[%c99] : memref<128xf32, #tpu.memory_space<smem>>
    %687 = vector.broadcast %686 : f32 to vector<8x128xf32>
    %688 = arith.mulf %687, %74 : vector<8x128xf32>
    %689 = arith.addf %685, %688 : vector<8x128xf32>
    %c100 = arith.constant 100 : index
    %690 = memref.load %arg4[%c100] : memref<128xf32, #tpu.memory_space<smem>>
    %691 = vector.broadcast %690 : f32 to vector<8x128xf32>
    %692 = arith.mulf %691, %90 : vector<8x128xf32>
    %693 = arith.addf %689, %692 : vector<8x128xf32>
    %c101 = arith.constant 101 : index
    %694 = memref.load %arg4[%c101] : memref<128xf32, #tpu.memory_space<smem>>
    %695 = vector.broadcast %694 : f32 to vector<8x128xf32>
    %696 = arith.mulf %695, %106 : vector<8x128xf32>
    %697 = arith.addf %693, %696 : vector<8x128xf32>
    %c102 = arith.constant 102 : index
    %698 = memref.load %arg4[%c102] : memref<128xf32, #tpu.memory_space<smem>>
    %699 = vector.broadcast %698 : f32 to vector<8x128xf32>
    %700 = arith.mulf %699, %122 : vector<8x128xf32>
    %701 = arith.addf %697, %700 : vector<8x128xf32>
    %c103 = arith.constant 103 : index
    %702 = memref.load %arg4[%c103] : memref<128xf32, #tpu.memory_space<smem>>
    %703 = vector.broadcast %702 : f32 to vector<8x128xf32>
    %704 = arith.mulf %703, %138 : vector<8x128xf32>
    %705 = arith.addf %701, %704 : vector<8x128xf32>
    %c104 = arith.constant 104 : index
    %706 = memref.load %arg4[%c104] : memref<128xf32, #tpu.memory_space<smem>>
    %707 = vector.broadcast %706 : f32 to vector<8x128xf32>
    %708 = arith.mulf %707, %154 : vector<8x128xf32>
    %709 = arith.addf %705, %708 : vector<8x128xf32>
    %c105 = arith.constant 105 : index
    %710 = memref.load %arg4[%c105] : memref<128xf32, #tpu.memory_space<smem>>
    %711 = vector.broadcast %710 : f32 to vector<8x128xf32>
    %712 = arith.mulf %711, %170 : vector<8x128xf32>
    %713 = arith.addf %709, %712 : vector<8x128xf32>
    %c106 = arith.constant 106 : index
    %714 = memref.load %arg4[%c106] : memref<128xf32, #tpu.memory_space<smem>>
    %715 = vector.broadcast %714 : f32 to vector<8x128xf32>
    %716 = arith.mulf %715, %186 : vector<8x128xf32>
    %717 = arith.addf %713, %716 : vector<8x128xf32>
    %c107 = arith.constant 107 : index
    %718 = memref.load %arg4[%c107] : memref<128xf32, #tpu.memory_space<smem>>
    %719 = vector.broadcast %718 : f32 to vector<8x128xf32>
    %720 = arith.mulf %719, %202 : vector<8x128xf32>
    %721 = arith.addf %717, %720 : vector<8x128xf32>
    %c108 = arith.constant 108 : index
    %722 = memref.load %arg4[%c108] : memref<128xf32, #tpu.memory_space<smem>>
    %723 = vector.broadcast %722 : f32 to vector<8x128xf32>
    %724 = arith.mulf %723, %218 : vector<8x128xf32>
    %725 = arith.addf %721, %724 : vector<8x128xf32>
    %c109 = arith.constant 109 : index
    %726 = memref.load %arg4[%c109] : memref<128xf32, #tpu.memory_space<smem>>
    %727 = vector.broadcast %726 : f32 to vector<8x128xf32>
    %728 = arith.mulf %727, %234 : vector<8x128xf32>
    %729 = arith.addf %725, %728 : vector<8x128xf32>
    %c110 = arith.constant 110 : index
    %730 = memref.load %arg4[%c110] : memref<128xf32, #tpu.memory_space<smem>>
    %731 = vector.broadcast %730 : f32 to vector<8x128xf32>
    %732 = arith.mulf %731, %250 : vector<8x128xf32>
    %733 = arith.addf %729, %732 : vector<8x128xf32>
    %c111 = arith.constant 111 : index
    %734 = memref.load %arg4[%c111] : memref<128xf32, #tpu.memory_space<smem>>
    %735 = vector.broadcast %734 : f32 to vector<8x128xf32>
    %736 = arith.mulf %735, %266 : vector<8x128xf32>
    %737 = arith.addf %733, %736 : vector<8x128xf32>
    %c6_97 = arith.constant 6 : index
    %738 = memref.load %arg5[%c6_97] : memref<8xf32, #tpu.memory_space<smem>>
    %739 = vector.broadcast %738 : f32 to vector<8x128xf32>
    %740 = arith.addf %737, %739 : vector<8x128xf32>
    %cst_98 = arith.constant 0.000000e+00 : f32
    %741 = vector.broadcast %cst_98 : f32 to vector<8x128xf32>
    %742 = arith.maximumf %740, %741 : vector<8x128xf32>
    %c112 = arith.constant 112 : index
    %743 = memref.load %arg4[%c112] : memref<128xf32, #tpu.memory_space<smem>>
    %744 = vector.broadcast %743 : f32 to vector<8x128xf32>
    %745 = arith.mulf %744, %26 : vector<8x128xf32>
    %c113 = arith.constant 113 : index
    %746 = memref.load %arg4[%c113] : memref<128xf32, #tpu.memory_space<smem>>
    %747 = vector.broadcast %746 : f32 to vector<8x128xf32>
    %748 = arith.mulf %747, %42 : vector<8x128xf32>
    %749 = arith.addf %745, %748 : vector<8x128xf32>
    %c114 = arith.constant 114 : index
    %750 = memref.load %arg4[%c114] : memref<128xf32, #tpu.memory_space<smem>>
    %751 = vector.broadcast %750 : f32 to vector<8x128xf32>
    %752 = arith.mulf %751, %58 : vector<8x128xf32>
    %753 = arith.addf %749, %752 : vector<8x128xf32>
    %c115 = arith.constant 115 : index
    %754 = memref.load %arg4[%c115] : memref<128xf32, #tpu.memory_space<smem>>
    %755 = vector.broadcast %754 : f32 to vector<8x128xf32>
    %756 = arith.mulf %755, %74 : vector<8x128xf32>
    %757 = arith.addf %753, %756 : vector<8x128xf32>
    %c116 = arith.constant 116 : index
    %758 = memref.load %arg4[%c116] : memref<128xf32, #tpu.memory_space<smem>>
    %759 = vector.broadcast %758 : f32 to vector<8x128xf32>
    %760 = arith.mulf %759, %90 : vector<8x128xf32>
    %761 = arith.addf %757, %760 : vector<8x128xf32>
    %c117 = arith.constant 117 : index
    %762 = memref.load %arg4[%c117] : memref<128xf32, #tpu.memory_space<smem>>
    %763 = vector.broadcast %762 : f32 to vector<8x128xf32>
    %764 = arith.mulf %763, %106 : vector<8x128xf32>
    %765 = arith.addf %761, %764 : vector<8x128xf32>
    %c118 = arith.constant 118 : index
    %766 = memref.load %arg4[%c118] : memref<128xf32, #tpu.memory_space<smem>>
    %767 = vector.broadcast %766 : f32 to vector<8x128xf32>
    %768 = arith.mulf %767, %122 : vector<8x128xf32>
    %769 = arith.addf %765, %768 : vector<8x128xf32>
    %c119 = arith.constant 119 : index
    %770 = memref.load %arg4[%c119] : memref<128xf32, #tpu.memory_space<smem>>
    %771 = vector.broadcast %770 : f32 to vector<8x128xf32>
    %772 = arith.mulf %771, %138 : vector<8x128xf32>
    %773 = arith.addf %769, %772 : vector<8x128xf32>
    %c120 = arith.constant 120 : index
    %774 = memref.load %arg4[%c120] : memref<128xf32, #tpu.memory_space<smem>>
    %775 = vector.broadcast %774 : f32 to vector<8x128xf32>
    %776 = arith.mulf %775, %154 : vector<8x128xf32>
    %777 = arith.addf %773, %776 : vector<8x128xf32>
    %c121 = arith.constant 121 : index
    %778 = memref.load %arg4[%c121] : memref<128xf32, #tpu.memory_space<smem>>
    %779 = vector.broadcast %778 : f32 to vector<8x128xf32>
    %780 = arith.mulf %779, %170 : vector<8x128xf32>
    %781 = arith.addf %777, %780 : vector<8x128xf32>
    %c122 = arith.constant 122 : index
    %782 = memref.load %arg4[%c122] : memref<128xf32, #tpu.memory_space<smem>>
    %783 = vector.broadcast %782 : f32 to vector<8x128xf32>
    %784 = arith.mulf %783, %186 : vector<8x128xf32>
    %785 = arith.addf %781, %784 : vector<8x128xf32>
    %c123 = arith.constant 123 : index
    %786 = memref.load %arg4[%c123] : memref<128xf32, #tpu.memory_space<smem>>
    %787 = vector.broadcast %786 : f32 to vector<8x128xf32>
    %788 = arith.mulf %787, %202 : vector<8x128xf32>
    %789 = arith.addf %785, %788 : vector<8x128xf32>
    %c124 = arith.constant 124 : index
    %790 = memref.load %arg4[%c124] : memref<128xf32, #tpu.memory_space<smem>>
    %791 = vector.broadcast %790 : f32 to vector<8x128xf32>
    %792 = arith.mulf %791, %218 : vector<8x128xf32>
    %793 = arith.addf %789, %792 : vector<8x128xf32>
    %c125 = arith.constant 125 : index
    %794 = memref.load %arg4[%c125] : memref<128xf32, #tpu.memory_space<smem>>
    %795 = vector.broadcast %794 : f32 to vector<8x128xf32>
    %796 = arith.mulf %795, %234 : vector<8x128xf32>
    %797 = arith.addf %793, %796 : vector<8x128xf32>
    %c126 = arith.constant 126 : index
    %798 = memref.load %arg4[%c126] : memref<128xf32, #tpu.memory_space<smem>>
    %799 = vector.broadcast %798 : f32 to vector<8x128xf32>
    %800 = arith.mulf %799, %250 : vector<8x128xf32>
    %801 = arith.addf %797, %800 : vector<8x128xf32>
    %c127 = arith.constant 127 : index
    %802 = memref.load %arg4[%c127] : memref<128xf32, #tpu.memory_space<smem>>
    %803 = vector.broadcast %802 : f32 to vector<8x128xf32>
    %804 = arith.mulf %803, %266 : vector<8x128xf32>
    %805 = arith.addf %801, %804 : vector<8x128xf32>
    %c7_99 = arith.constant 7 : index
    %806 = memref.load %arg5[%c7_99] : memref<8xf32, #tpu.memory_space<smem>>
    %807 = vector.broadcast %806 : f32 to vector<8x128xf32>
    %808 = arith.addf %805, %807 : vector<8x128xf32>
    %cst_100 = arith.constant 0.000000e+00 : f32
    %809 = vector.broadcast %cst_100 : f32 to vector<8x128xf32>
    %810 = arith.maximumf %808, %809 : vector<8x128xf32>
    %c0_101 = arith.constant 0 : index
    %811 = memref.load %arg6[%c0_101] : memref<8xf32, #tpu.memory_space<smem>>
    %812 = vector.broadcast %811 : f32 to vector<8x128xf32>
    %813 = arith.mulf %812, %334 : vector<8x128xf32>
    %c1_102 = arith.constant 1 : index
    %814 = memref.load %arg6[%c1_102] : memref<8xf32, #tpu.memory_space<smem>>
    %815 = vector.broadcast %814 : f32 to vector<8x128xf32>
    %816 = arith.mulf %815, %402 : vector<8x128xf32>
    %817 = arith.addf %813, %816 : vector<8x128xf32>
    %c2_103 = arith.constant 2 : index
    %818 = memref.load %arg6[%c2_103] : memref<8xf32, #tpu.memory_space<smem>>
    %819 = vector.broadcast %818 : f32 to vector<8x128xf32>
    %820 = arith.mulf %819, %470 : vector<8x128xf32>
    %821 = arith.addf %817, %820 : vector<8x128xf32>
    %c3_104 = arith.constant 3 : index
    %822 = memref.load %arg6[%c3_104] : memref<8xf32, #tpu.memory_space<smem>>
    %823 = vector.broadcast %822 : f32 to vector<8x128xf32>
    %824 = arith.mulf %823, %538 : vector<8x128xf32>
    %825 = arith.addf %821, %824 : vector<8x128xf32>
    %c4_105 = arith.constant 4 : index
    %826 = memref.load %arg6[%c4_105] : memref<8xf32, #tpu.memory_space<smem>>
    %827 = vector.broadcast %826 : f32 to vector<8x128xf32>
    %828 = arith.mulf %827, %606 : vector<8x128xf32>
    %829 = arith.addf %825, %828 : vector<8x128xf32>
    %c5_106 = arith.constant 5 : index
    %830 = memref.load %arg6[%c5_106] : memref<8xf32, #tpu.memory_space<smem>>
    %831 = vector.broadcast %830 : f32 to vector<8x128xf32>
    %832 = arith.mulf %831, %674 : vector<8x128xf32>
    %833 = arith.addf %829, %832 : vector<8x128xf32>
    %c6_107 = arith.constant 6 : index
    %834 = memref.load %arg6[%c6_107] : memref<8xf32, #tpu.memory_space<smem>>
    %835 = vector.broadcast %834 : f32 to vector<8x128xf32>
    %836 = arith.mulf %835, %742 : vector<8x128xf32>
    %837 = arith.addf %833, %836 : vector<8x128xf32>
    %c7_108 = arith.constant 7 : index
    %838 = memref.load %arg6[%c7_108] : memref<8xf32, #tpu.memory_space<smem>>
    %839 = vector.broadcast %838 : f32 to vector<8x128xf32>
    %840 = arith.mulf %839, %810 : vector<8x128xf32>
    %841 = arith.addf %837, %840 : vector<8x128xf32>
    %c0_109 = arith.constant 0 : index
    %842 = memref.load %arg7[%c0_109] : memref<1xf32, #tpu.memory_space<smem>>
    %843 = vector.broadcast %842 : f32 to vector<8x128xf32>
    %844 = arith.addf %841, %843 : vector<8x128xf32>
    %cst_110 = arith.constant 0.000000e+00 : f32
    %845 = vector.broadcast %cst_110 : f32 to vector<8x128xf32>
    %846 = arith.subf %845, %844 : vector<8x128xf32>
    %847 = math.exp %846 : vector<8x128xf32>
    %cst_111 = arith.constant 1.000000e+00 : f32
    %848 = vector.broadcast %cst_111 : f32 to vector<8x128xf32>
    %849 = arith.addf %848, %847 : vector<8x128xf32>
    %cst_112 = arith.constant 1.000000e+00 : f32
    %850 = vector.broadcast %cst_112 : f32 to vector<8x128xf32>
    %851 = arith.divf %850, %849 : vector<8x128xf32>
    %852 = arith.index_cast %1 : i32 to index
    %c0_113 = arith.constant 0 : index
    %853 = vector.load %arg8[%852, %c0_113] : memref<8x128xf32, #tpu.memory_space<vmem>>, vector<8x128xf32>
    tpu.vector_store %arg8[%852, %c0_113], %851 {strides = array<i32>} : memref<8x128xf32, #tpu.memory_space<vmem>>, vector<8x128xf32>,
    %c1_i32 = arith.constant 1 : i32
    return
  }
  func.func @transform_0(%arg0: i32) -> (i32, i32, i32) {
    %c0_i32 = arith.constant 0 : i32
    %c0_i32_0 = arith.constant 0 : i32
    %c0_i32_1 = arith.constant 0 : i32
    return %c0_i32, %arg0, %c0_i32_0 : i32, i32, i32
  }
  func.func @transform_1(%arg0: i32) -> i32 {
    %c0_i32 = arith.constant 0 : i32
    %c0_i32_0 = arith.constant 0 : i32
    return %c0_i32 : i32
  }
  func.func @transform_2(%arg0: i32) -> i32 {
    %c0_i32 = arith.constant 0 : i32
    %c0_i32_0 = arith.constant 0 : i32
    return %c0_i32 : i32
  }
  func.func @transform_3(%arg0: i32) -> i32 {
    %c0_i32 = arith.constant 0 : i32
    %c0_i32_0 = arith.constant 0 : i32
    return %c0_i32 : i32
  }
  func.func @transform_4(%arg0: i32) -> i32 {
    %c0_i32 = arith.constant 0 : i32
    %c0_i32_0 = arith.constant 0 : i32
    return %c0_i32 : i32
  }
  func.func @transform_5(%arg0: i32) -> i32 {
    %c0_i32 = arith.constant 0 : i32
    %c0_i32_0 = arith.constant 0 : i32
    return %c0_i32 : i32
  }
  func.func @transform_6(%arg0: i32) -> i32 {
    %c0_i32 = arith.constant 0 : i32
    %c0_i32_0 = arith.constant 0 : i32
    return %c0_i32 : i32
  }
  func.func @transform_7(%arg0: i32) -> (i32, i32) {
    %c0_i32 = arith.constant 0 : i32
    %c0_i32_0 = arith.constant 0 : i32
    return %arg0, %c0_i32 : i32, i32
  }
}

</mosaic_0001>

<llo_original>
// kernel: tpu_custom_call.1
$region0: #{tpu_custom_call.1}
  #allocation0 [shape = 'u32[]', space=smem, size = 0x4, offset = 0x4, fixed_abs, tag = 'smem constant byte address 0x4 - core index']
  #allocation1 [shape = 'u32[144,128]{1,0:T(1,128)}', space=vmem, size = 0x12000, scoped, tag = 'internal scratch']
  #allocation2 [shape = 'f32[1]{0:T(128)S(6)}', space=smem, size = 0x200, scoped, tag = 'scoped memory for tpu_custom_call.1']
  %s0 = inlined_call_operand.hbm [shape: f32[3,8,128], index: 0, kind: input, shape index: {}]
  %s1 = inlined_call_operand.vmem [shape: f32[48], index: 1, kind: input, shape index: {}]
  %s2 = inlined_call_operand.vmem [shape: f32[16], index: 2, kind: input, shape index: {}]
  %s3 = inlined_call_operand.vmem [shape: f32[128], index: 3, kind: input, shape index: {}]
  %s4 = inlined_call_operand.vmem [shape: f32[8], index: 4, kind: input, shape index: {}]
  %s5 = inlined_call_operand.vmem [shape: f32[8], index: 5, kind: input, shape index: {}]
  %s6 = inlined_call_operand.<no memory space> [shape: f32[1], index: 6, kind: input, shape index: {}]
  %s7 = inlined_call_operand.hbm [shape: f32[8,128], index: 7, kind: output, shape index: {}]
  %s8 = sld [smem:[#allocation0]]
  $region62: #{tpu_custom_call.1} parent=0
    _
  %s10 = ssub.s32 1, %s8
  %s11 = scalar_select 0, %s10, %s8
  %12 = sst [smem:[#allocation2]] %s6
  $region1: #{tpu_custom_call.1} parent=0
    #allocation3 [shape = 'u8[12288]{0}', space=vmem, size = 0x3000, scoped, tag = 'input window, operand 0, single buffered']
    #allocation4 [shape = 's32[1]{0}', space=sflag, size = 0x4, scoped, tag = 'scoped memory for tpu_custom_call.1']
    #allocation5 [shape = 's32[1]{0}', space=sflag, size = 0x4, scoped, tag = 'scoped memory for tpu_custom_call.1']
    #allocation6 [shape = 's32[1]{0}', space=sflag, size = 0x4, scoped, tag = 'scoped memory for tpu_custom_call.1']
    #allocation7 [shape = 'u8[512]{0}', space=smem, size = 0x200, scoped, tag = 'input window, operand 1, single buffered']
    #allocation8 [shape = 'u8[512]{0}', space=smem, size = 0x200, scoped, tag = 'input window, operand 2, single buffered']
    #allocation9 [shape = 's32[1]{0}', space=sflag, size = 0x4, scoped, tag = 'scoped memory for tpu_custom_call.1']
    #allocation10 [shape = 'u8[512]{0}', space=smem, size = 0x200, scoped, tag = 'input window, operand 3, single buffered']
    #allocation11 [shape = 'u8[512]{0}', space=smem, size = 0x200, scoped, tag = 'input window, operand 4, single buffered']
    #allocation12 [shape = 's32[1]{0}', space=sflag, size = 0x4, scoped, tag = 'scoped memory for tpu_custom_call.1']
    #allocation13 [shape = 'u8[512]{0}', space=smem, size = 0x200, scoped, tag = 'input window, operand 5, single buffered']
    #allocation14 [shape = 'u8[4096]{0}', space=vmem, size = 0x1000, scoped, tag = 'output window, operand 0, single buffered']
    %13 = vsyncpa [#allocation4], 0
    %14 = vsyncpa [#allocation6], 0
    %15 = vsyncpa [#allocation9], 0
    %16 = vsyncpa [#allocation12], 0
    %17 = vsyncpa [#allocation5], 0
    // Predicated region
    $region2: #{tpu_custom_call.1} parent=1 // pred_check
      _
    $region3: #{tpu_custom_call.1} parent=1 // pred_check_branch
      %19 = sbr.rel (0) target = $region5
    $region4: #{tpu_custom_call.1} parent=1 // pred_region
      %s21 = ssub.s32 384, 384
      %22 = vsyncadd [#allocation4], %s21
      %s23 = sshll.u32 [#allocation3], 4
      %s24 = int_to_ptr.vmem [resolvable:$true] %s23
      %29 = dma.hbm_to_vmem [thread:$0]  %s0, 384, %s24, [#allocation4], 128, 128, 8
    $region5: #{tpu_custom_call.1} parent=1 // pred_fallthru
      _
    // Predicated region
    $region6: #{tpu_custom_call.1} parent=1 // pred_check
      _
    $region7: #{tpu_custom_call.1} parent=1 // pred_check_branch
      %31 = sbr.rel (0) target = $region9
    $region8: #{tpu_custom_call.1} parent=1 // pred_region
      %s33 = ssub.s32 16, 16
      %34 = vsyncadd [#allocation6], %s33
      %s36 = sshll.u32 %s1, 4
      %s37 = int_to_ptr.vmem [resolvable:$true] %s36
      %39 = dma.vmem_to_smem %s37, 16, [#allocation7], [#allocation6]
    $region9: #{tpu_custom_call.1} parent=1 // pred_fallthru
      _
    // Predicated region
    $region10: #{tpu_custom_call.1} parent=1 // pred_check
      _
    $region11: #{tpu_custom_call.1} parent=1 // pred_check_branch
      %41 = sbr.rel (0) target = $region13
    $region12: #{tpu_custom_call.1} parent=1 // pred_region
      %s43 = ssub.s32 16, 16
      %44 = vsyncadd [#allocation9], %s43
      %s46 = sshll.u32 %s2, 4
      %s47 = int_to_ptr.vmem [resolvable:$true] %s46
      %49 = dma.vmem_to_smem %s47, 16, [#allocation8], [#allocation9]
    $region13: #{tpu_custom_call.1} parent=1 // pred_fallthru
      _
    // Predicated region
    $region14: #{tpu_custom_call.1} parent=1 // pred_check
      _
    $region15: #{tpu_custom_call.1} parent=1 // pred_check_branch
      %51 = sbr.rel (0) target = $region17
    $region16: #{tpu_custom_call.1} parent=1 // pred_region
      %s53 = ssub.s32 16, 16
      %54 = vsyncadd [#allocation9], %s53
      %s56 = sshll.u32 %s3, 4
      %s57 = int_to_ptr.vmem [resolvable:$true] %s56
      %59 = dma.vmem_to_smem %s57, 16, [#allocation10], [#allocation9]
    $region17: #{tpu_custom_call.1} parent=1 // pred_fallthru
      _
    // Predicated region
    $region18: #{tpu_custom_call.1} parent=1 // pred_check
      _
    $region19: #{tpu_custom_call.1} parent=1 // pred_check_branch
      %61 = sbr.rel (0) target = $region21
    $region20: #{tpu_custom_call.1} parent=1 // pred_region
      %s63 = ssub.s32 16, 16
      %64 = vsyncadd [#allocation12], %s63
      %s66 = sshll.u32 %s4, 4
      %s67 = int_to_ptr.vmem [resolvable:$true] %s66
      %69 = dma.vmem_to_smem %s67, 16, [#allocation11], [#allocation12]
    $region21: #{tpu_custom_call.1} parent=1 // pred_fallthru
      _
    // Predicated region
    $region22: #{tpu_custom_call.1} parent=1 // pred_check
      _
    $region23: #{tpu_custom_call.1} parent=1 // pred_check_branch
      %71 = sbr.rel (0) target = $region25
    $region24: #{tpu_custom_call.1} parent=1 // pred_region
      %s73 = ssub.s32 16, 16
      %74 = vsyncadd [#allocation12], %s73
      %s76 = sshll.u32 %s5, 4
      %s77 = int_to_ptr.vmem [resolvable:$true] %s76
      %79 = dma.vmem_to_smem %s77, 16, [#allocation13], [#allocation12]
    $region25: #{tpu_custom_call.1} parent=1 // pred_fallthru
      _
    // Predicated region
    $region26: #{tpu_custom_call.1} parent=1 // pred_check
      _
    $region27: #{tpu_custom_call.1} parent=1 // pred_check_branch
      %81 = sbr.rel (0) target = $region29
    $region28: #{tpu_custom_call.1} parent=1 // pred_region
      _
    $region29: #{tpu_custom_call.1} parent=1 // pred_fallthru
      _
    // Predicated region
    $region30: #{tpu_custom_call.1} parent=1 // pred_check
      _
    $region31: #{tpu_custom_call.1} parent=1 // pred_check_branch
      %83 = sbr.rel (0) target = $region33
    $region32: #{tpu_custom_call.1} parent=1 // pred_region
      %84 = dma.done [#allocation4], 384
    $region33: #{tpu_custom_call.1} parent=1 // pred_fallthru
      _
    // Predicated region
    $region34: #{tpu_custom_call.1} parent=1 // pred_check
      _
    $region35: #{tpu_custom_call.1} parent=1 // pred_check_branch
      %86 = sbr.rel (0) target = $region37
    $region36: #{tpu_custom_call.1} parent=1 // pred_region
      %87 = dma.done [#allocation6], 16
    $region37: #{tpu_custom_call.1} parent=1 // pred_fallthru
      _
    // Predicated region
    $region38: #{tpu_custom_call.1} parent=1 // pred_check
      _
    $region39: #{tpu_custom_call.1} parent=1 // pred_check_branch
      %89 = sbr.rel (0) target = $region41
    $region40: #{tpu_custom_call.1} parent=1 // pred_region
      %90 = dma.done [#allocation9], 16
    $region41: #{tpu_custom_call.1} parent=1 // pred_fallthru
      _
    // Predicated region
    $region42: #{tpu_custom_call.1} parent=1 // pred_check
      _
    $region43: #{tpu_custom_call.1} parent=1 // pred_check_branch
      %92 = sbr.rel (0) target = $region45
    $region44: #{tpu_custom_call.1} parent=1 // pred_region
      %93 = dma.done [#allocation9], 16
    $region45: #{tpu_custom_call.1} parent=1 // pred_fallthru
      _
    // Predicated region
    $region46: #{tpu_custom_call.1} parent=1 // pred_check
      _
    $region47: #{tpu_custom_call.1} parent=1 // pred_check_branch
      %95 = sbr.rel (0) target = $region49
    $region48: #{tpu_custom_call.1} parent=1 // pred_region
      %96 = dma.done [#allocation12], 16
    $region49: #{tpu_custom_call.1} parent=1 // pred_fallthru
      _
    // Predicated region
    $region50: #{tpu_custom_call.1} parent=1 // pred_check
      _
    $region51: #{tpu_custom_call.1} parent=1 // pred_check_branch
      %98 = sbr.rel (0) target = $region53
    $region52: #{tpu_custom_call.1} parent=1 // pred_region
      %99 = dma.done [#allocation12], 16
    $region53: #{tpu_custom_call.1} parent=1 // pred_fallthru
      _
    %100 = sfence
    %v101 = vld [vmem:[#allocation3] sm:$0xff]
    %s102 = sadd.s32 0, 8
    %s103 = scalar_lea.vmem [#allocation3], %s102
    %v104 = vld [vmem:[%s103] sm:$0xff]
    %s105 = sadd.s32 0, 16
    %s106 = scalar_lea.vmem [#allocation3], %s105
    %v107 = vld [vmem:[%s106] sm:$0xff]
    %s108 = sld [smem:[#allocation7]]
    %v109 = vstv %s108
    %v110 = vmul.f32 %v109, %v101
    %s111 = sld [smem:[#allocation7 + $0x1]]
    %v112 = vstv %s111
    %v113 = vmul.f32 %v112, %v104
    %v114 = vadd.f32 %v110, %v113
    %s115 = sld [smem:[#allocation7 + $0x2]]
    %v116 = vstv %s115
    %v117 = vmul.f32 %v116, %v107
    %v118 = vadd.f32 %v114, %v117
    %s119 = sld [smem:[#allocation8]]
    %v120 = vstv %s119
    %v121 = vadd.f32 %v118, %v120
    %v122 = vmax.f32 %v121, 0.0
    %s123 = sld [smem:[#allocation7 + $0x3]]
    %v124 = vstv %s123
    %v125 = vmul.f32 %v124, %v101
    %s126 = sld [smem:[#allocation7 + $0x4]]
    %v127 = vstv %s126
    %v128 = vmul.f32 %v127, %v104
    %v129 = vadd.f32 %v125, %v128
    %s130 = sld [smem:[#allocation7 + $0x5]]
    %v131 = vstv %s130
    %v132 = vmul.f32 %v131, %v107
    %v133 = vadd.f32 %v129, %v132
    %s134 = sld [smem:[#allocation8 + $0x1]]
    %v135 = vstv %s134
    %v136 = vadd.f32 %v133, %v135
    %v137 = vmax.f32 %v136, 0.0
    %s138 = sld [smem:[#allocation7 + $0x6]]
    %v139 = vstv %s138
    %v140 = vmul.f32 %v139, %v101
    %s141 = sld [smem:[#allocation7 + $0x7]]
    %v142 = vstv %s141
    %v143 = vmul.f32 %v142, %v104
    %v144 = vadd.f32 %v140, %v143
    %s145 = sld [smem:[#allocation7 + $0x8]]
    %v146 = vstv %s145
    %v147 = vmul.f32 %v146, %v107
    %v148 = vadd.f32 %v144, %v147
    %s149 = sld [smem:[#allocation8 + $0x2]]
    %v150 = vstv %s149
    %v151 = vadd.f32 %v148, %v150
    %v152 = vmax.f32 %v151, 0.0
    %s153 = sld [smem:[#allocation7 + $0x9]]
    %v154 = vstv %s153
    %v155 = vmul.f32 %v154, %v101
    %s156 = sld [smem:[#allocation7 + $0xa]]
    %v157 = vstv %s156
    %v158 = vmul.f32 %v157, %v104
    %v159 = vadd.f32 %v155, %v158
    %s160 = sld [smem:[#allocation7 + $0xb]]
    %v161 = vstv %s160
    %v162 = vmul.f32 %v161, %v107
    %v163 = vadd.f32 %v159, %v162
    %s164 = sld [smem:[#allocation8 + $0x3]]
    %v165 = vstv %s164
    %v166 = vadd.f32 %v163, %v165
    %v167 = vmax.f32 %v166, 0.0
    %s168 = sld [smem:[#allocation7 + $0xc]]
    %v169 = vstv %s168
    %v170 = vmul.f32 %v169, %v101
    %s171 = sld [smem:[#allocation7 + $0xd]]
    %v172 = vstv %s171
    %v173 = vmul.f32 %v172, %v104
    %v174 = vadd.f32 %v170, %v173
    %s175 = sld [smem:[#allocation7 + $0xe]]
    %v176 = vstv %s175
    %v177 = vmul.f32 %v176, %v107
    %v178 = vadd.f32 %v174, %v177
    %s179 = sld [smem:[#allocation8 + $0x4]]
    %v180 = vstv %s179
    %v181 = vadd.f32 %v178, %v180
    %v182 = vmax.f32 %v181, 0.0
    %s183 = sld [smem:[#allocation7 + $0xf]]
    %v184 = vstv %s183
    %v185 = vmul.f32 %v184, %v101
    %s186 = sld [smem:[#allocation7 + $0x10]]
    %v187 = vstv %s186
    %v188 = vmul.f32 %v187, %v104
    %v189 = vadd.f32 %v185, %v188
    %s190 = sld [smem:[#allocation7 + $0x11]]
    %v191 = vstv %s190
    %v192 = vmul.f32 %v191, %v107
    %v193 = vadd.f32 %v189, %v192
    %s194 = sld [smem:[#allocation8 + $0x5]]
    %v195 = vstv %s194
    %v196 = vadd.f32 %v193, %v195
    %v197 = vmax.f32 %v196, 0.0
    %s198 = sld [smem:[#allocation7 + $0x12]]
    %v199 = vstv %s198
    %v200 = vmul.f32 %v199, %v101
    %s201 = sld [smem:[#allocation7 + $0x13]]
    %v202 = vstv %s201
    %v203 = vmul.f32 %v202, %v104
    %v204 = vadd.f32 %v200, %v203
    %s205 = sld [smem:[#allocation7 + $0x14]]
    %v206 = vstv %s205
    %v207 = vmul.f32 %v206, %v107
    %v208 = vadd.f32 %v204, %v207
    %s209 = sld [smem:[#allocation8 + $0x6]]
    %v210 = vstv %s209
    %v211 = vadd.f32 %v208, %v210
    %v212 = vmax.f32 %v211, 0.0
    %s213 = sld [smem:[#allocation7 + $0x15]]
    %v214 = vstv %s213
    %v215 = vmul.f32 %v214, %v101
    %s216 = sld [smem:[#allocation7 + $0x16]]
    %v217 = vstv %s216
    %v218 = vmul.f32 %v217, %v104
    %v219 = vadd.f32 %v215, %v218
    %s220 = sld [smem:[#allocation7 + $0x17]]
    %v221 = vstv %s220
    %v222 = vmul.f32 %v221, %v107
    %v223 = vadd.f32 %v219, %v222
    %s224 = sld [smem:[#allocation8 + $0x7]]
    %v225 = vstv %s224
    %v226 = vadd.f32 %v223, %v225
    %v227 = vmax.f32 %v226, 0.0
    %s228 = sld [smem:[#allocation7 + $0x18]]
    %v229 = vstv %s228
    %v230 = vmul.f32 %v229, %v101
    %s231 = sld [smem:[#allocation7 + $0x19]]
    %v232 = vstv %s231
    %v233 = vmul.f32 %v232, %v104
    %v234 = vadd.f32 %v230, %v233
    %s235 = sld [smem:[#allocation7 + $0x1a]]
    %v236 = vstv %s235
    %v237 = vmul.f32 %v236, %v107
    %v238 = vadd.f32 %v234, %v237
    %s239 = sld [smem:[#allocation8 + $0x8]]
    %v240 = vstv %s239
    %v241 = vadd.f32 %v238, %v240
    %v242 = vmax.f32 %v241, 0.0
    %s243 = sld [smem:[#allocation7 + $0x1b]]
    %v244 = vstv %s243
    %v245 = vmul.f32 %v244, %v101
    %s246 = sld [smem:[#allocation7 + $0x1c]]
    %v247 = vstv %s246
    %v248 = vmul.f32 %v247, %v104
    %v249 = vadd.f32 %v245, %v248
    %s250 = sld [smem:[#allocation7 + $0x1d]]
    %v251 = vstv %s250
    %v252 = vmul.f32 %v251, %v107
    %v253 = vadd.f32 %v249, %v252
    %s254 = sld [smem:[#allocation8 + $0x9]]
    %v255 = vstv %s254
    %v256 = vadd.f32 %v253, %v255
    %v257 = vmax.f32 %v256, 0.0
    %s258 = sld [smem:[#allocation7 + $0x1e]]
    %v259 = vstv %s258
    %v260 = vmul.f32 %v259, %v101
    %s261 = sld [smem:[#allocation7 + $0x1f]]
    %v262 = vstv %s261
    %v263 = vmul.f32 %v262, %v104
    %v264 = vadd.f32 %v260, %v263
    %s265 = sld [smem:[#allocation7 + $0x20]]
    %v266 = vstv %s265
    %v267 = vmul.f32 %v266, %v107
    %v268 = vadd.f32 %v264, %v267
    %s269 = sld [smem:[#allocation8 + $0xa]]
    %v270 = vstv %s269
    %v271 = vadd.f32 %v268, %v270
    %v272 = vmax.f32 %v271, 0.0
    %s273 = sld [smem:[#allocation7 + $0x21]]
    %v274 = vstv %s273
    %v275 = vmul.f32 %v274, %v101
    %s276 = sld [smem:[#allocation7 + $0x22]]
    %v277 = vstv %s276
    %v278 = vmul.f32 %v277, %v104
    %v279 = vadd.f32 %v275, %v278
    %s280 = sld [smem:[#allocation7 + $0x23]]
    %v281 = vstv %s280
    %v282 = vmul.f32 %v281, %v107
    %v283 = vadd.f32 %v279, %v282
    %s284 = sld [smem:[#allocation8 + $0xb]]
    %v285 = vstv %s284
    %v286 = vadd.f32 %v283, %v285
    %v287 = vmax.f32 %v286, 0.0
    %s288 = sld [smem:[#allocation7 + $0x24]]
    %v289 = vstv %s288
    %v290 = vmul.f32 %v289, %v101
    %s291 = sld [smem:[#allocation7 + $0x25]]
    %v292 = vstv %s291
    %v293 = vmul.f32 %v292, %v104
    %v294 = vadd.f32 %v290, %v293
    %s295 = sld [smem:[#allocation7 + $0x26]]
    %v296 = vstv %s295
    %v297 = vmul.f32 %v296, %v107
    %v298 = vadd.f32 %v294, %v297
    %s299 = sld [smem:[#allocation8 + $0xc]]
    %v300 = vstv %s299
    %v301 = vadd.f32 %v298, %v300
    %v302 = vmax.f32 %v301, 0.0
    %s303 = sld [smem:[#allocation7 + $0x27]]
    %v304 = vstv %s303
    %v305 = vmul.f32 %v304, %v101
    %s306 = sld [smem:[#allocation7 + $0x28]]
    %v307 = vstv %s306
    %v308 = vmul.f32 %v307, %v104
    %v309 = vadd.f32 %v305, %v308
    %s310 = sld [smem:[#allocation7 + $0x29]]
    %v311 = vstv %s310
    %v312 = vmul.f32 %v311, %v107
    %v313 = vadd.f32 %v309, %v312
    %s314 = sld [smem:[#allocation8 + $0xd]]
    %v315 = vstv %s314
    %v316 = vadd.f32 %v313, %v315
    %v317 = vmax.f32 %v316, 0.0
    %s318 = sld [smem:[#allocation7 + $0x2a]]
    %v319 = vstv %s318
    %v320 = vmul.f32 %v319, %v101
    %s321 = sld [smem:[#allocation7 + $0x2b]]
    %v322 = vstv %s321
    %v323 = vmul.f32 %v322, %v104
    %v324 = vadd.f32 %v320, %v323
    %s325 = sld [smem:[#allocation7 + $0x2c]]
    %v326 = vstv %s325
    %v327 = vmul.f32 %v326, %v107
    %v328 = vadd.f32 %v324, %v327
    %s329 = sld [smem:[#allocation8 + $0xe]]
    %v330 = vstv %s329
    %v331 = vadd.f32 %v328, %v330
    %v332 = vmax.f32 %v331, 0.0
    %s333 = sld [smem:[#allocation7 + $0x2d]]
    %v334 = vstv %s333
    %v335 = vmul.f32 %v334, %v101
    %s336 = sld [smem:[#allocation7 + $0x2e]]
    %v337 = vstv %s336
    %v338 = vmul.f32 %v337, %v104
    %v339 = vadd.f32 %v335, %v338
    %s340 = sld [smem:[#allocation7 + $0x2f]]
    %v341 = vstv %s340
    %v342 = vmul.f32 %v341, %v107
    %v343 = vadd.f32 %v339, %v342
    %s344 = sld [smem:[#allocation8 + $0xf]]
    %v345 = vstv %s344
    %v346 = vadd.f32 %v343, %v345
    %v347 = vmax.f32 %v346, 0.0
    %s348 = sld [smem:[#allocation10]]
    %v349 = vstv %s348
    %v350 = vmul.f32 %v349, %v122
    %s351 = sld [smem:[#allocation10 + $0x1]]
    %v352 = vstv %s351
    %v353 = vmul.f32 %v352, %v137
    %v354 = vadd.f32 %v350, %v353
    %s355 = sld [smem:[#allocation10 + $0x2]]
    %v356 = vstv %s355
    %v357 = vmul.f32 %v356, %v152
    %v358 = vadd.f32 %v354, %v357
    %s359 = sld [smem:[#allocation10 + $0x3]]
    %v360 = vstv %s359
    %v361 = vmul.f32 %v360, %v167
    %v362 = vadd.f32 %v358, %v361
    %s363 = sld [smem:[#allocation10 + $0x4]]
    %v364 = vstv %s363
    %v365 = vmul.f32 %v364, %v182
    %v366 = vadd.f32 %v362, %v365
    %s367 = sld [smem:[#allocation10 + $0x5]]
    %v368 = vstv %s367
    %v369 = vmul.f32 %v368, %v197
    %v370 = vadd.f32 %v366, %v369
    %s371 = sld [smem:[#allocation10 + $0x6]]
    %v372 = vstv %s371
    %v373 = vmul.f32 %v372, %v212
    %v374 = vadd.f32 %v370, %v373
    %s375 = sld [smem:[#allocation10 + $0x7]]
    %v376 = vstv %s375
    %v377 = vmul.f32 %v376, %v227
    %v378 = vadd.f32 %v374, %v377
    %s379 = sld [smem:[#allocation10 + $0x8]]
    %v380 = vstv %s379
    %v381 = vmul.f32 %v380, %v242
    %v382 = vadd.f32 %v378, %v381
    %s383 = sld [smem:[#allocation10 + $0x9]]
    %v384 = vstv %s383
    %v385 = vmul.f32 %v384, %v257
    %v386 = vadd.f32 %v382, %v385
    %s387 = sld [smem:[#allocation10 + $0xa]]
    %v388 = vstv %s387
    %v389 = vmul.f32 %v388, %v272
    %v390 = vadd.f32 %v386, %v389
    %s391 = sld [smem:[#allocation10 + $0xb]]
    %v392 = vstv %s391
    %v393 = vmul.f32 %v392, %v287
    %v394 = vadd.f32 %v390, %v393
    %s395 = sld [smem:[#allocation10 + $0xc]]
    %v396 = vstv %s395
    %v397 = vmul.f32 %v396, %v302
    %v398 = vadd.f32 %v394, %v397
    %s399 = sld [smem:[#allocation10 + $0xd]]
    %v400 = vstv %s399
    %v401 = vmul.f32 %v400, %v317
    %v402 = vadd.f32 %v398, %v401
    %s403 = sld [smem:[#allocation10 + $0xe]]
    %v404 = vstv %s403
    %v405 = vmul.f32 %v404, %v332
    %v406 = vadd.f32 %v402, %v405
    %s407 = sld [smem:[#allocation10 + $0xf]]
    %v408 = vstv %s407
    %v409 = vmul.f32 %v408, %v347
    %v410 = vadd.f32 %v406, %v409
    %s411 = sld [smem:[#allocation11]]
    %v412 = vstv %s411
    %v413 = vadd.f32 %v410, %v412
    %v414 = vmax.f32 %v413, 0.0
    %s415 = sld [smem:[#allocation10 + $0x10]]
    %v416 = vstv %s415
    %v417 = vmul.f32 %v416, %v122
    %s418 = sld [smem:[#allocation10 + $0x11]]
    %v419 = vstv %s418
    %v420 = vmul.f32 %v419, %v137
    %v421 = vadd.f32 %v417, %v420
    %s422 = sld [smem:[#allocation10 + $0x12]]
    %v423 = vstv %s422
    %v424 = vmul.f32 %v423, %v152
    %v425 = vadd.f32 %v421, %v424
    %s426 = sld [smem:[#allocation10 + $0x13]]
    %v427 = vstv %s426
    %v428 = vmul.f32 %v427, %v167
    %v429 = vadd.f32 %v425, %v428
    %s430 = sld [smem:[#allocation10 + $0x14]]
    %v431 = vstv %s430
    %v432 = vmul.f32 %v431, %v182
    %v433 = vadd.f32 %v429, %v432
    %s434 = sld [smem:[#allocation10 + $0x15]]
    %v435 = vstv %s434
    %v436 = vmul.f32 %v435, %v197
    %v437 = vadd.f32 %v433, %v436
    %s438 = sld [smem:[#allocation10 + $0x16]]
    %v439 = vstv %s438
    %v440 = vmul.f32 %v439, %v212
    %v441 = vadd.f32 %v437, %v440
    %s442 = sld [smem:[#allocation10 + $0x17]]
    %v443 = vstv %s442
    %v444 = vmul.f32 %v443, %v227
    %v445 = vadd.f32 %v441, %v444
    %s446 = sld [smem:[#allocation10 + $0x18]]
    %v447 = vstv %s446
    %v448 = vmul.f32 %v447, %v242
    %v449 = vadd.f32 %v445, %v448
    %s450 = sld [smem:[#allocation10 + $0x19]]
    %v451 = vstv %s450
    %v452 = vmul.f32 %v451, %v257
    %v453 = vadd.f32 %v449, %v452
    %s454 = sld [smem:[#allocation10 + $0x1a]]
    %v455 = vstv %s454
    %v456 = vmul.f32 %v455, %v272
    %v457 = vadd.f32 %v453, %v456
    %s458 = sld [smem:[#allocation10 + $0x1b]]
    %v459 = vstv %s458
    %v460 = vmul.f32 %v459, %v287
    %v461 = vadd.f32 %v457, %v460
    %s462 = sld [smem:[#allocation10 + $0x1c]]
    %v463 = vstv %s462
    %v464 = vmul.f32 %v463, %v302
    %v465 = vadd.f32 %v461, %v464
    %s466 = sld [smem:[#allocation10 + $0x1d]]
    %v467 = vstv %s466
    %v468 = vmul.f32 %v467, %v317
    %v469 = vadd.f32 %v465, %v468
    %s470 = sld [smem:[#allocation10 + $0x1e]]
    %v471 = vstv %s470
    %v472 = vmul.f32 %v471, %v332
    %v473 = vadd.f32 %v469, %v472
    %s474 = sld [smem:[#allocation10 + $0x1f]]
    %v475 = vstv %s474
    %v476 = vmul.f32 %v475, %v347
    %v477 = vadd.f32 %v473, %v476
    %s478 = sld [smem:[#allocation11 + $0x1]]
    %v479 = vstv %s478
    %v480 = vadd.f32 %v477, %v479
    %v481 = vmax.f32 %v480, 0.0
    %s482 = sld [smem:[#allocation10 + $0x20]]
    %v483 = vstv %s482
    %v484 = vmul.f32 %v483, %v122
    %s485 = sld [smem:[#allocation10 + $0x21]]
    %v486 = vstv %s485
    %v487 = vmul.f32 %v486, %v137
    %v488 = vadd.f32 %v484, %v487
    %s489 = sld [smem:[#allocation10 + $0x22]]
    %v490 = vstv %s489
    %v491 = vmul.f32 %v490, %v152
    %v492 = vadd.f32 %v488, %v491
    %s493 = sld [smem:[#allocation10 + $0x23]]
    %v494 = vstv %s493
    %v495 = vmul.f32 %v494, %v167
    %v496 = vadd.f32 %v492, %v495
    %s497 = sld [smem:[#allocation10 + $0x24]]
    %v498 = vstv %s497
    %v499 = vmul.f32 %v498, %v182
    %v500 = vadd.f32 %v496, %v499
    %s501 = sld [smem:[#allocation10 + $0x25]]
    %v502 = vstv %s501
    %v503 = vmul.f32 %v502, %v197
    %v504 = vadd.f32 %v500, %v503
    %s505 = sld [smem:[#allocation10 + $0x26]]
    %v506 = vstv %s505
    %v507 = vmul.f32 %v506, %v212
    %v508 = vadd.f32 %v504, %v507
    %s509 = sld [smem:[#allocation10 + $0x27]]
    %v510 = vstv %s509
    %v511 = vmul.f32 %v510, %v227
    %v512 = vadd.f32 %v508, %v511
    %s513 = sld [smem:[#allocation10 + $0x28]]
    %v514 = vstv %s513
    %v515 = vmul.f32 %v514, %v242
    %v516 = vadd.f32 %v512, %v515
    %s517 = sld [smem:[#allocation10 + $0x29]]
    %v518 = vstv %s517
    %v519 = vmul.f32 %v518, %v257
    %v520 = vadd.f32 %v516, %v519
    %s521 = sld [smem:[#allocation10 + $0x2a]]
    %v522 = vstv %s521
    %v523 = vmul.f32 %v522, %v272
    %v524 = vadd.f32 %v520, %v523
    %s525 = sld [smem:[#allocation10 + $0x2b]]
    %v526 = vstv %s525
    %v527 = vmul.f32 %v526, %v287
    %v528 = vadd.f32 %v524, %v527
    %s529 = sld [smem:[#allocation10 + $0x2c]]
    %v530 = vstv %s529
    %v531 = vmul.f32 %v530, %v302
    %v532 = vadd.f32 %v528, %v531
    %s533 = sld [smem:[#allocation10 + $0x2d]]
    %v534 = vstv %s533
    %v535 = vmul.f32 %v534, %v317
    %v536 = vadd.f32 %v532, %v535
    %s537 = sld [smem:[#allocation10 + $0x2e]]
    %v538 = vstv %s537
    %v539 = vmul.f32 %v538, %v332
    %v540 = vadd.f32 %v536, %v539
    %s541 = sld [smem:[#allocation10 + $0x2f]]
    %v542 = vstv %s541
    %v543 = vmul.f32 %v542, %v347
    %v544 = vadd.f32 %v540, %v543
    %s545 = sld [smem:[#allocation11 + $0x2]]
    %v546 = vstv %s545
    %v547 = vadd.f32 %v544, %v546
    %v548 = vmax.f32 %v547, 0.0
    %s549 = sld [smem:[#allocation10 + $0x30]]
    %v550 = vstv %s549
    %v551 = vmul.f32 %v550, %v122
    %s552 = sld [smem:[#allocation10 + $0x31]]
    %v553 = vstv %s552
    %v554 = vmul.f32 %v553, %v137
    %v555 = vadd.f32 %v551, %v554
    %s556 = sld [smem:[#allocation10 + $0x32]]
    %v557 = vstv %s556
    %v558 = vmul.f32 %v557, %v152
    %v559 = vadd.f32 %v555, %v558
    %s560 = sld [smem:[#allocation10 + $0x33]]
    %v561 = vstv %s560
    %v562 = vmul.f32 %v561, %v167
    %v563 = vadd.f32 %v559, %v562
    %s564 = sld [smem:[#allocation10 + $0x34]]
    %v565 = vstv %s564
    %v566 = vmul.f32 %v565, %v182
    %v567 = vadd.f32 %v563, %v566
    %s568 = sld [smem:[#allocation10 + $0x35]]
    %v569 = vstv %s568
    %v570 = vmul.f32 %v569, %v197
    %v571 = vadd.f32 %v567, %v570
    %s572 = sld [smem:[#allocation10 + $0x36]]
    %v573 = vstv %s572
    %v574 = vmul.f32 %v573, %v212
    %v575 = vadd.f32 %v571, %v574
    %s576 = sld [smem:[#allocation10 + $0x37]]
    %v577 = vstv %s576
    %v578 = vmul.f32 %v577, %v227
    %v579 = vadd.f32 %v575, %v578
    %s580 = sld [smem:[#allocation10 + $0x38]]
    %v581 = vstv %s580
    %v582 = vmul.f32 %v581, %v242
    %v583 = vadd.f32 %v579, %v582
    %s584 = sld [smem:[#allocation10 + $0x39]]
    %v585 = vstv %s584
    %v586 = vmul.f32 %v585, %v257
    %v587 = vadd.f32 %v583, %v586
    %s588 = sld [smem:[#allocation10 + $0x3a]]
    %v589 = vstv %s588
    %v590 = vmul.f32 %v589, %v272
    %v591 = vadd.f32 %v587, %v590
    %s592 = sld [smem:[#allocation10 + $0x3b]]
    %v593 = vstv %s592
    %v594 = vmul.f32 %v593, %v287
    %v595 = vadd.f32 %v591, %v594
    %s596 = sld [smem:[#allocation10 + $0x3c]]
    %v597 = vstv %s596
    %v598 = vmul.f32 %v597, %v302
    %v599 = vadd.f32 %v595, %v598
    %s600 = sld [smem:[#allocation10 + $0x3d]]
    %v601 = vstv %s600
    %v602 = vmul.f32 %v601, %v317
    %v603 = vadd.f32 %v599, %v602
    %s604 = sld [smem:[#allocation10 + $0x3e]]
    %v605 = vstv %s604
    %v606 = vmul.f32 %v605, %v332
    %v607 = vadd.f32 %v603, %v606
    %s608 = sld [smem:[#allocation10 + $0x3f]]
    %v609 = vstv %s608
    %v610 = vmul.f32 %v609, %v347
    %v611 = vadd.f32 %v607, %v610
    %s612 = sld [smem:[#allocation11 + $0x3]]
    %v613 = vstv %s612
    %v614 = vadd.f32 %v611, %v613
    %v615 = vmax.f32 %v614, 0.0
    %s616 = sld [smem:[#allocation10 + $0x40]]
    %v617 = vstv %s616
    %v618 = vmul.f32 %v617, %v122
    %s619 = sld [smem:[#allocation10 + $0x41]]
    %v620 = vstv %s619
    %v621 = vmul.f32 %v620, %v137
    %v622 = vadd.f32 %v618, %v621
    %s623 = sld [smem:[#allocation10 + $0x42]]
    %v624 = vstv %s623
    %v625 = vmul.f32 %v624, %v152
    %v626 = vadd.f32 %v622, %v625
    %s627 = sld [smem:[#allocation10 + $0x43]]
    %v628 = vstv %s627
    %v629 = vmul.f32 %v628, %v167
    %v630 = vadd.f32 %v626, %v629
    %s631 = sld [smem:[#allocation10 + $0x44]]
    %v632 = vstv %s631
    %v633 = vmul.f32 %v632, %v182
    %v634 = vadd.f32 %v630, %v633
    %s635 = sld [smem:[#allocation10 + $0x45]]
    %v636 = vstv %s635
    %v637 = vmul.f32 %v636, %v197
    %v638 = vadd.f32 %v634, %v637
    %s639 = sld [smem:[#allocation10 + $0x46]]
    %v640 = vstv %s639
    %v641 = vmul.f32 %v640, %v212
    %v642 = vadd.f32 %v638, %v641
    %s643 = sld [smem:[#allocation10 + $0x47]]
    %v644 = vstv %s643
    %v645 = vmul.f32 %v644, %v227
    %v646 = vadd.f32 %v642, %v645
    %s647 = sld [smem:[#allocation10 + $0x48]]
    %v648 = vstv %s647
    %v649 = vmul.f32 %v648, %v242
    %v650 = vadd.f32 %v646, %v649
    %s651 = sld [smem:[#allocation10 + $0x49]]
    %v652 = vstv %s651
    %v653 = vmul.f32 %v652, %v257
    %v654 = vadd.f32 %v650, %v653
    %s655 = sld [smem:[#allocation10 + $0x4a]]
    %v656 = vstv %s655
    %v657 = vmul.f32 %v656, %v272
    %v658 = vadd.f32 %v654, %v657
    %s659 = sld [smem:[#allocation10 + $0x4b]]
    %v660 = vstv %s659
    %v661 = vmul.f32 %v660, %v287
    %v662 = vadd.f32 %v658, %v661
    %s663 = sld [smem:[#allocation10 + $0x4c]]
    %v664 = vstv %s663
    %v665 = vmul.f32 %v664, %v302
    %v666 = vadd.f32 %v662, %v665
    %s667 = sld [smem:[#allocation10 + $0x4d]]
    %v668 = vstv %s667
    %v669 = vmul.f32 %v668, %v317
    %v670 = vadd.f32 %v666, %v669
    %s671 = sld [smem:[#allocation10 + $0x4e]]
    %v672 = vstv %s671
    %v673 = vmul.f32 %v672, %v332
    %v674 = vadd.f32 %v670, %v673
    %s675 = sld [smem:[#allocation10 + $0x4f]]
    %v676 = vstv %s675
    %v677 = vmul.f32 %v676, %v347
    %v678 = vadd.f32 %v674, %v677
    %s679 = sld [smem:[#allocation11 + $0x4]]
    %v680 = vstv %s679
    %v681 = vadd.f32 %v678, %v680
    %v682 = vmax.f32 %v681, 0.0
    %s683 = sld [smem:[#allocation10 + $0x50]]
    %v684 = vstv %s683
    %v685 = vmul.f32 %v684, %v122
    %s686 = sld [smem:[#allocation10 + $0x51]]
    %v687 = vstv %s686
    %v688 = vmul.f32 %v687, %v137
    %v689 = vadd.f32 %v685, %v688
    %s690 = sld [smem:[#allocation10 + $0x52]]
    %v691 = vstv %s690
    %v692 = vmul.f32 %v691, %v152
    %v693 = vadd.f32 %v689, %v692
    %s694 = sld [smem:[#allocation10 + $0x53]]
    %v695 = vstv %s694
    %v696 = vmul.f32 %v695, %v167
    %v697 = vadd.f32 %v693, %v696
    %s698 = sld [smem:[#allocation10 + $0x54]]
    %v699 = vstv %s698
    %v700 = vmul.f32 %v699, %v182
    %v701 = vadd.f32 %v697, %v700
    %s702 = sld [smem:[#allocation10 + $0x55]]
    %v703 = vstv %s702
    %v704 = vmul.f32 %v703, %v197
    %v705 = vadd.f32 %v701, %v704
    %s706 = sld [smem:[#allocation10 + $0x56]]
    %v707 = vstv %s706
    %v708 = vmul.f32 %v707, %v212
    %v709 = vadd.f32 %v705, %v708
    %s710 = sld [smem:[#allocation10 + $0x57]]
    %v711 = vstv %s710
    %v712 = vmul.f32 %v711, %v227
    %v713 = vadd.f32 %v709, %v712
    %s714 = sld [smem:[#allocation10 + $0x58]]
    %v715 = vstv %s714
    %v716 = vmul.f32 %v715, %v242
    %v717 = vadd.f32 %v713, %v716
    %s718 = sld [smem:[#allocation10 + $0x59]]
    %v719 = vstv %s718
    %v720 = vmul.f32 %v719, %v257
    %v721 = vadd.f32 %v717, %v720
    %s722 = sld [smem:[#allocation10 + $0x5a]]
    %v723 = vstv %s722
    %v724 = vmul.f32 %v723, %v272
    %v725 = vadd.f32 %v721, %v724
    %s726 = sld [smem:[#allocation10 + $0x5b]]
    %v727 = vstv %s726
    %v728 = vmul.f32 %v727, %v287
    %v729 = vadd.f32 %v725, %v728
    %s730 = sld [smem:[#allocation10 + $0x5c]]
    %v731 = vstv %s730
    %v732 = vmul.f32 %v731, %v302
    %v733 = vadd.f32 %v729, %v732
    %s734 = sld [smem:[#allocation10 + $0x5d]]
    %v735 = vstv %s734
    %v736 = vmul.f32 %v735, %v317
    %v737 = vadd.f32 %v733, %v736
    %s738 = sld [smem:[#allocation10 + $0x5e]]
    %v739 = vstv %s738
    %v740 = vmul.f32 %v739, %v332
    %v741 = vadd.f32 %v737, %v740
    %s742 = sld [smem:[#allocation10 + $0x5f]]
    %v743 = vstv %s742
    %v744 = vmul.f32 %v743, %v347
    %v745 = vadd.f32 %v741, %v744
    %s746 = sld [smem:[#allocation11 + $0x5]]
    %v747 = vstv %s746
    %v748 = vadd.f32 %v745, %v747
    %v749 = vmax.f32 %v748, 0.0
    %s750 = sld [smem:[#allocation10 + $0x60]]
    %v751 = vstv %s750
    %v752 = vmul.f32 %v751, %v122
    %s753 = sld [smem:[#allocation10 + $0x61]]
    %v754 = vstv %s753
    %v755 = vmul.f32 %v754, %v137
    %v756 = vadd.f32 %v752, %v755
    %s757 = sld [smem:[#allocation10 + $0x62]]
    %v758 = vstv %s757
    %v759 = vmul.f32 %v758, %v152
    %v760 = vadd.f32 %v756, %v759
    %s761 = sld [smem:[#allocation10 + $0x63]]
    %v762 = vstv %s761
    %v763 = vmul.f32 %v762, %v167
    %v764 = vadd.f32 %v760, %v763
    %s765 = sld [smem:[#allocation10 + $0x64]]
    %v766 = vstv %s765
    %v767 = vmul.f32 %v766, %v182
    %v768 = vadd.f32 %v764, %v767
    %s769 = sld [smem:[#allocation10 + $0x65]]
    %v770 = vstv %s769
    %v771 = vmul.f32 %v770, %v197
    %v772 = vadd.f32 %v768, %v771
    %s773 = sld [smem:[#allocation10 + $0x66]]
    %v774 = vstv %s773
    %v775 = vmul.f32 %v774, %v212
    %v776 = vadd.f32 %v772, %v775
    %s777 = sld [smem:[#allocation10 + $0x67]]
    %v778 = vstv %s777
    %v779 = vmul.f32 %v778, %v227
    %v780 = vadd.f32 %v776, %v779
    %s781 = sld [smem:[#allocation10 + $0x68]]
    %v782 = vstv %s781
    %v783 = vmul.f32 %v782, %v242
    %v784 = vadd.f32 %v780, %v783
    %s785 = sld [smem:[#allocation10 + $0x69]]
    %v786 = vstv %s785
    %v787 = vmul.f32 %v786, %v257
    %v788 = vadd.f32 %v784, %v787
    %s789 = sld [smem:[#allocation10 + $0x6a]]
    %v790 = vstv %s789
    %v791 = vmul.f32 %v790, %v272
    %v792 = vadd.f32 %v788, %v791
    %s793 = sld [smem:[#allocation10 + $0x6b]]
    %v794 = vstv %s793
    %v795 = vmul.f32 %v794, %v287
    %v796 = vadd.f32 %v792, %v795
    %s797 = sld [smem:[#allocation10 + $0x6c]]
    %v798 = vstv %s797
    %v799 = vmul.f32 %v798, %v302
    %v800 = vadd.f32 %v796, %v799
    %s801 = sld [smem:[#allocation10 + $0x6d]]
    %v802 = vstv %s801
    %v803 = vmul.f32 %v802, %v317
    %v804 = vadd.f32 %v800, %v803
    %s805 = sld [smem:[#allocation10 + $0x6e]]
    %v806 = vstv %s805
    %v807 = vmul.f32 %v806, %v332
    %v808 = vadd.f32 %v804, %v807
    %s809 = sld [smem:[#allocation10 + $0x6f]]
    %v810 = vstv %s809
    %v811 = vmul.f32 %v810, %v347
    %v812 = vadd.f32 %v808, %v811
    %s813 = sld [smem:[#allocation11 + $0x6]]
    %v814 = vstv %s813
    %v815 = vadd.f32 %v812, %v814
    %v816 = vmax.f32 %v815, 0.0
    %s817 = sld [smem:[#allocation10 + $0x70]]
    %v818 = vstv %s817
    %v819 = vmul.f32 %v818, %v122
    %s820 = sld [smem:[#allocation10 + $0x71]]
    %v821 = vstv %s820
    %v822 = vmul.f32 %v821, %v137
    %v823 = vadd.f32 %v819, %v822
    %s824 = sld [smem:[#allocation10 + $0x72]]
    %v825 = vstv %s824
    %v826 = vmul.f32 %v825, %v152
    %v827 = vadd.f32 %v823, %v826
    %s828 = sld [smem:[#allocation10 + $0x73]]
    %v829 = vstv %s828
    %v830 = vmul.f32 %v829, %v167
    %v831 = vadd.f32 %v827, %v830
    %s832 = sld [smem:[#allocation10 + $0x74]]
    %v833 = vstv %s832
    %v834 = vmul.f32 %v833, %v182
    %v835 = vadd.f32 %v831, %v834
    %s836 = sld [smem:[#allocation10 + $0x75]]
    %v837 = vstv %s836
    %v838 = vmul.f32 %v837, %v197
    %v839 = vadd.f32 %v835, %v838
    %s840 = sld [smem:[#allocation10 + $0x76]]
    %v841 = vstv %s840
    %v842 = vmul.f32 %v841, %v212
    %v843 = vadd.f32 %v839, %v842
    %s844 = sld [smem:[#allocation10 + $0x77]]
    %v845 = vstv %s844
    %v846 = vmul.f32 %v845, %v227
    %v847 = vadd.f32 %v843, %v846
    %s848 = sld [smem:[#allocation10 + $0x78]]
    %v849 = vstv %s848
    %v850 = vmul.f32 %v849, %v242
    %v851 = vadd.f32 %v847, %v850
    %s852 = sld [smem:[#allocation10 + $0x79]]
    %v853 = vstv %s852
    %v854 = vmul.f32 %v853, %v257
    %v855 = vadd.f32 %v851, %v854
    %s856 = sld [smem:[#allocation10 + $0x7a]]
    %v857 = vstv %s856
    %v858 = vmul.f32 %v857, %v272
    %v859 = vadd.f32 %v855, %v858
    %s860 = sld [smem:[#allocation10 + $0x7b]]
    %v861 = vstv %s860
    %v862 = vmul.f32 %v861, %v287
    %v863 = vadd.f32 %v859, %v862
    %s864 = sld [smem:[#allocation10 + $0x7c]]
    %v865 = vstv %s864
    %v866 = vmul.f32 %v865, %v302
    %v867 = vadd.f32 %v863, %v866
    %s868 = sld [smem:[#allocation10 + $0x7d]]
    %v869 = vstv %s868
    %v870 = vmul.f32 %v869, %v317
    %v871 = vadd.f32 %v867, %v870
    %s872 = sld [smem:[#allocation10 + $0x7e]]
    %v873 = vstv %s872
    %v874 = vmul.f32 %v873, %v332
    %v875 = vadd.f32 %v871, %v874
    %s876 = sld [smem:[#allocation10 + $0x7f]]
    %v877 = vstv %s876
    %v878 = vmul.f32 %v877, %v347
    %v879 = vadd.f32 %v875, %v878
    %s880 = sld [smem:[#allocation11 + $0x7]]
    %v881 = vstv %s880
    %v882 = vadd.f32 %v879, %v881
    %v883 = vmax.f32 %v882, 0.0
    %s884 = sld [smem:[#allocation13]]
    %v885 = vstv %s884
    %v886 = vmul.f32 %v885, %v414
    %s887 = sld [smem:[#allocation13 + $0x1]]
    %v888 = vstv %s887
    %v889 = vmul.f32 %v888, %v481
    %v890 = vadd.f32 %v886, %v889
    %s891 = sld [smem:[#allocation13 + $0x2]]
    %v892 = vstv %s891
    %v893 = vmul.f32 %v892, %v548
    %v894 = vadd.f32 %v890, %v893
    %s895 = sld [smem:[#allocation13 + $0x3]]
    %v896 = vstv %s895
    %v897 = vmul.f32 %v896, %v615
    %v898 = vadd.f32 %v894, %v897
    %s899 = sld [smem:[#allocation13 + $0x4]]
    %v900 = vstv %s899
    %v901 = vmul.f32 %v900, %v682
    %v902 = vadd.f32 %v898, %v901
    %s903 = sld [smem:[#allocation13 + $0x5]]
    %v904 = vstv %s903
    %v905 = vmul.f32 %v904, %v749
    %v906 = vadd.f32 %v902, %v905
    %s907 = sld [smem:[#allocation13 + $0x6]]
    %v908 = vstv %s907
    %v909 = vmul.f32 %v908, %v816
    %v910 = vadd.f32 %v906, %v909
    %s911 = sld [smem:[#allocation13 + $0x7]]
    %v912 = vstv %s911
    %v913 = vmul.f32 %v912, %v883
    %v914 = vadd.f32 %v910, %v913
    %s915 = sld [smem:[#allocation2]]
    %v916 = vstv %s915
    %v917 = vadd.f32 %v914, %v916
    %v918 = vsub.f32 0.0, %v917
    %v919 = vmul.f32 %v918, 1.442695
    %v920 = vpow.pop %v919
    %v921 = vadd.f32 %v920, 1.0
    %v922 = vrcp.pop %v921
    %v923 = vmul.f32 1.0, %v922
    %924 = vst [vmem:[#allocation14] sm:$0xff] %v923
    // Predicated region
    $region54: #{tpu_custom_call.1} parent=1 // pred_check
      _
    $region55: #{tpu_custom_call.1} parent=1 // pred_check_branch
      %926 = sbr.rel (0) target = $region57
    $region56: #{tpu_custom_call.1} parent=1 // pred_region
      %s928 = ssub.s32 128, 128
      %929 = vsyncadd [#allocation5], %s928
      %s931 = sshll.u32 [#allocation14], 4
      %s932 = int_to_ptr.vmem [resolvable:$true] %s931
      %934 = dma.vmem_to_hbm [thread:$0]  %s932, 128, %s7, [#allocation5]
    $region57: #{tpu_custom_call.1} parent=1 // pred_fallthru
      _
    // Predicated region
    $region58: #{tpu_custom_call.1} parent=1 // pred_check
      _
    $region59: #{tpu_custom_call.1} parent=1 // pred_check_branch
      %936 = sbr.rel (0) target = $region61
    $region60: #{tpu_custom_call.1} parent=1 // pred_region
      %937 = dma.done [#allocation5], 128
    $region61: #{tpu_custom_call.1} parent=1 // pred_fallthru
      _
    %938 = vsyncpa [#allocation4], 1
    %939 = vsyncpa [#allocation5], 1
    %940 = vsyncpa [#allocation6], 1
    %941 = vsyncpa [#allocation9], 1
    %942 = vsyncpa [#allocation12], 1

</llo_original>
